<compile_context>
chip_gen: v7x
topology: tpu7x:2x2x1
jax: 0.10.0
libtpu: 0.0.40
codegen_flags: <defaults>
</compile_context>

<pallas_src>
import numpy as np

import jax
import jax.numpy as jnp
from jax.experimental import pallas as pl
from jax.experimental.pallas import tpu as pltpu


# ----------------------------------------------------------------------------
# Model dimensions (implied by a typical GrapPA config)
# ----------------------------------------------------------------------------

NODE_RAW = 16       # geometric node-encoder feature size
EDGE_RAW = 36       # geometric edge-encoder feature size
GLOB_RAW = 16       # geometric global-encoder feature size
HIDDEN = 64         # GNN MLP hidden width
NODE_FEAT = 64      # gnn.node_feature_size
EDGE_FEAT = 64      # gnn.edge_feature_size
GLOB_FEAT = 32      # gnn.global_feature_size
N_NODE_CLASSES = 5  # node_pred out_channels
N_EDGE_CLASSES = 2  # edge_pred out_channels
N_GLOB_CLASSES = 2  # global_pred out_channels


def _rup(n, m):
    return ((n + m - 1) // m) * m


def _pick_tiling(M):
    """Pick (Mp, tm) for the row grid.

    The kernel is HBM-/step-overhead-bound, not VMEM- or MXU-bound, so prefer
    big tiles (amortize the ~0.35 us fixed per-step cost), keep >=2 grid steps
    whenever possible (v7x dual TensorCores split the row axis) and keep row
    padding around or below ~12%.
    """
    Mp = _rup(max(M, 16), 16)
    if Mp <= 128:
        return Mp, Mp                      # single tiny tile
    best = None
    for tm in (2048, 1024, 512, 256, 128):
        mp = _rup(Mp, tm)
        if mp // tm < 2:                   # need >=2 steps for dual-TC split
            continue
        waste_ok = (mp - M) <= 0.12 * mp
        key = (0 if waste_ok else 1, mp, -tm)
        if best is None or key < best[0]:
            best = (key, tm, mp)
    if best is None:                       # safety fallback: single tile
        return Mp, Mp
    _, tm, mp = best
    return mp, tm


# ----------------------------------------------------------------------------
# Pallas kernel: fused 2-layer MLP + linear prediction head, packed output
# ----------------------------------------------------------------------------

def _mlp2_head_kernel(x_ref, w1_ref, b1_ref, w2_ref, b2_ref, w3_ref, b3_ref,
                      out_ref):
    """out = relu(relu(x@w1+b1)@w2+b2)  (+ head logits packed in padding lanes).

    w3/b3 are column-shifted at init so the logits land in output lanes
    [n_out, n_out + n_classes), which are exactly zero in the feature tile
    (zero weight/bias padding + ReLU).  Hence `feat + logits` packs both into
    ONE lane-dense bf16 output stream.
    """
    x = x_ref[...]                                                    # bf16
    h = jnp.dot(x, w1_ref[...], preferred_element_type=jnp.float32)  # MXU, f32 acc
    h = jnp.maximum(h + b1_ref[...], 0.0)
    f = jnp.dot(h.astype(jnp.bfloat16), w2_ref[...],
                preferred_element_type=jnp.float32)
    f = jnp.maximum(f + b2_ref[...], 0.0)                            # (tm, 128)
    logits = jnp.dot(f.astype(jnp.bfloat16), w3_ref[...],
                     preferred_element_type=jnp.float32) + b3_ref[...]
    out_ref[...] = (f + logits).astype(jnp.bfloat16)                 # lane-dense


def _build_padded_rows(parts, Kp):
    """Concatenate feature segments in bf16 with the lane padding folded into
    the same concat (single materialization of the kernel input in HBM)."""
    M = parts[0].shape[0]
    pieces = [p.astype(jnp.bfloat16) for p in parts]
    K = sum(p.shape[1] for p in pieces)
    assert K <= Kp
    if K < Kp:
        pieces.append(jnp.zeros((M, Kp - K), jnp.bfloat16))
    return jnp.concatenate(pieces, axis=1)


def pallas_mlp2_head(parts, p, n_out, n_classes):
    """Row-tiled, pipelined fused MLP(2) + head.  Returns (features, logits).

    `parts` is a list of 2-D (M, k_i) arrays concatenated along the lane axis.
    Features come back in bf16 (downstream reductions accumulate in f32),
    logits in f32.
    """
    Kp, Hp = p["w1"].shape
    Np = p["w2"].shape[1]
    M = parts[0].shape[0]

    x = _build_padded_rows(parts, Kp)                    # (M, Kp) bf16
    Mp, tm = _pick_tiling(M)
    if Mp > M:
        x = jnp.pad(x, ((0, Mp - M), (0, 0)))

    packed = pl.pallas_call(
        _mlp2_head_kernel,
        out_shape=jax.ShapeDtypeStruct((Mp, Np), jnp.bfloat16),
        grid=(Mp // tm,),
        in_specs=[
            pl.BlockSpec((tm, Kp), lambda i: (i, 0)),    # activations: tiled rows
            pl.BlockSpec((Kp, Hp), lambda i: (0, 0)),    # weights: VMEM-resident
            pl.BlockSpec((1, Hp), lambda i: (0, 0)),
            pl.BlockSpec((Hp, Np), lambda i: (0, 0)),
            pl.BlockSpec((1, Np), lambda i: (0, 0)),
            pl.BlockSpec((Np, Np), lambda i: (0, 0)),
            pl.BlockSpec((1, Np), lambda i: (0, 0)),
        ],
        out_specs=pl.BlockSpec((tm, Np), lambda i: (i, 0)),
        compiler_params=pltpu.CompilerParams(
            dimension_semantics=("parallel",),           # row split across TCs
            vmem_limit_bytes=32 * 1024 * 1024),
    )(x, p["w1"], p["b1"], p["w2"], p["b2"], p["w3"], p["b3"])

    feat = packed[:M, :n_out]                                    # bf16
    logits = packed[:M, n_out:n_out + n_classes].astype(jnp.float32)
    return feat, logits


def dense_mlp2_head(parts, p, n_out, n_classes):
    """Tiny-M path (global MLP, M = num_batches ~ 1-16 rows): plain XLA dots.

    A pallas_call here is pure fixed cost (separate launch + ~100 KB weight
    DMA for a couple of rows); XLA fuses this with the surrounding segment
    means instead.
    """
    Kp = p["w1"].shape[0]
    xp = _build_padded_rows(parts, Kp)
    h = jnp.maximum(jnp.dot(xp, p["w1"],
                            preferred_element_type=jnp.float32) + p["b1"], 0.0)
    f = jnp.maximum(jnp.dot(h.astype(jnp.bfloat16), p["w2"],
                            preferred_element_type=jnp.float32) + p["b2"], 0.0)
    logits = jnp.dot(f.astype(jnp.bfloat16), p["w3"],
                     preferred_element_type=jnp.float32) + p["b3"]
    return f[:, :n_out].astype(jnp.bfloat16), logits[:, n_out:n_out + n_classes]


# ----------------------------------------------------------------------------
# Deterministic parameter initialization — padded/shifted ONCE at init time
# ----------------------------------------------------------------------------

def _init_linear(key, fan_in, fan_out):
    k1, k2 = jax.random.split(key)
    scale = 1.0 / np.sqrt(fan_in)
    w = jax.random.uniform(k1, (fan_in, fan_out), jnp.float32, -scale, scale)
    b = jax.random.uniform(k2, (fan_out,), jnp.float32, -scale, scale)
    return w, b


def _pad_to(x, rows, cols, dtype):
    x = jnp.asarray(x)
    return jnp.pad(x, ((0, rows - x.shape[0]), (0, cols - x.shape[1]))).astype(dtype)


def _make_padded_mlp(key, k_in, hidden, n_out, n_classes):
    """Two-layer MLP + linear head, weights pre-padded to lane multiples (bf16).

    Head weights/bias are column-shifted so logits land in output lanes
    [n_out, n_out + n_classes) — the kernel then packs feat+logits into one
    lane-dense output (no masked partial stores).
    """
    k1, k2, k3 = jax.random.split(key, 3)
    w1, b1 = _init_linear(k1, k_in, hidden)
    w2, b2 = _init_linear(k2, hidden, n_out)
    w3, b3 = _init_linear(k3, n_out, n_classes)
    Kp = _rup(max(k_in, 128), 128)
    Hp = _rup(max(hidden, 128), 128)
    Np = _rup(max(n_out, 128), 128)
    assert n_out + n_classes <= Np, "logits must fit in the feat padding lanes"
    w3p = jnp.zeros((Np, Np), jnp.float32).at[:n_out, n_out:n_out + n_classes].set(w3)
    b3p = jnp.zeros((1, Np), jnp.float32).at[0, n_out:n_out + n_classes].set(b3)
    return {
        "w1": _pad_to(w1, Kp, Hp, jnp.bfloat16),
        "b1": _pad_to(b1[None, :], 1, Hp, jnp.float32),
        "w2": _pad_to(w2, Hp, Np, jnp.bfloat16),
        "b2": _pad_to(b2[None, :], 1, Np, jnp.float32),
        "w3": w3p.astype(jnp.bfloat16),
        "b3": b3p,
    }


def init_grappa_params(key):
    ks = jax.random.split(key, 3)
    e_in = 2 * NODE_RAW + EDGE_RAW + GLOB_RAW
    n_in = NODE_RAW + EDGE_FEAT + GLOB_RAW
    g_in = GLOB_RAW + NODE_FEAT + EDGE_FEAT
    return {
        "edge": _make_padded_mlp(ks[0], e_in, HIDDEN, EDGE_FEAT, N_EDGE_CLASSES),
        "node": _make_padded_mlp(ks[1], n_in, HIDDEN, NODE_FEAT, N_NODE_CLASSES),
        "global": _make_padded_mlp(ks[2], g_in, HIDDEN, GLOB_FEAT, N_GLOB_CLASSES),
    }


# ----------------------------------------------------------------------------
# Encoders + GNN forward (glue = segment ops / gathers; matmuls = Pallas)
# ----------------------------------------------------------------------------

def _segment_mean(x, seg_ids, num_segments):
    x = x.astype(jnp.float32)            # bf16 features -> f32 accumulation
    s = jax.ops.segment_sum(x, seg_ids, num_segments)
    c = jax.ops.segment_sum(jnp.ones((x.shape[0],), jnp.float32), seg_ids, num_segments)
    return s / jnp.maximum(c, 1.0)[:, None]


def node_encoder(coords, values, clust_ids, num_clusters):
    """Cluster geometric node features (centroid, spread, extents, counts, charge)."""
    ones = jnp.ones((coords.shape[0],), jnp.float32)
    counts_raw = jax.ops.segment_sum(ones, clust_ids, num_clusters)
    valid = counts_raw > 0                      # guard empty clusters (+/-inf)
    counts = jnp.maximum(counts_raw, 1.0)
    cent = jax.ops.segment_sum(coords, clust_ids, num_clusters) / counts[:, None]
    sq = jax.ops.segment_sum(coords ** 2, clust_ids, num_clusters) / counts[:, None]
    spread = jnp.sqrt(jnp.maximum(sq - cent ** 2, 0.0))
    cmin = jnp.where(valid[:, None],
                     jax.ops.segment_min(coords, clust_ids, num_clusters), 0.0)
    cmax = jnp.where(valid[:, None],
                     jax.ops.segment_max(coords, clust_ids, num_clusters), 0.0)
    vsum = jax.ops.segment_sum(values, clust_ids, num_clusters)
    vmean = vsum / counts
    feats = jnp.concatenate(
        [cent, spread, cmin, cmax,
         counts_raw[:, None], jnp.log1p(counts_raw)[:, None],
         vsum[:, None], vmean[:, None]], axis=1)  # (C, 16)
    return feats, cent


def edge_encoder(node_raw, cent, edge_index):
    """Cluster-pair geometric edge features."""
    src, dst = edge_index[:, 0], edge_index[:, 1]
    disp = cent[dst] - cent[src]
    dist = jnp.linalg.norm(disp, axis=1, keepdims=True)
    return jnp.concatenate([node_raw[src], node_raw[dst], disp, dist], axis=1)  # (E, 36)


def global_encoder(node_raw, node_batch, num_batches):
    """Per-image global features = mean of node geometric features."""
    return _segment_mean(node_raw, node_batch, num_batches)  # (B, 16)


def gnn_forward(params, x, e, u, edge_index, node_batch):
    """One MetaLayer-style message-passing step with fused prediction heads."""
    src, dst = edge_index[:, 0], edge_index[:, 1]
    edge_batch = node_batch[src]

    # Edge update + edge head (single Pallas kernel).
    # TODO(synk): for E >> 1e4, replace the XLA-side gather/concat with an
    # in-kernel scalar-prefetch gather (PrefetchScalarGridSpec + src/dst/batch
    # index arrays, VMEM-resident x/u) so the (E, 84) concat is never
    # materialized in HBM.
    e_out, edge_pred = pallas_mlp2_head(
        [x[src], x[dst], e, u[edge_batch]], params["edge"],
        EDGE_FEAT, N_EDGE_CLASSES)

    # Node update + node head.
    agg = _segment_mean(e_out, dst, x.shape[0])
    x_out, node_pred = pallas_mlp2_head(
        [x, agg, u[node_batch]], params["node"], NODE_FEAT, N_NODE_CLASSES)

    # Global update + global head (tiny M -> plain XLA dots, no kernel launch).
    num_batches = u.shape[0]
    n_mean = _segment_mean(x_out, node_batch, num_batches)
    e_mean = _segment_mean(e_out, edge_batch, num_batches)
    u_out, global_pred = dense_mlp2_head(
        [u, n_mean, e_mean], params["global"], GLOB_FEAT, N_GLOB_CLASSES)

    return {
        "node_features": x_out, "edge_features": e_out, "global_features": u_out,
        "node_pred": node_pred, "edge_pred": edge_pred, "global_pred": global_pred,
    }


def grappa_forward(params, data, edge_index, clust_ids, node_batch,
                   num_clusters, num_batches):
    """GrapPA forward: encoders -> GNN backbone -> (fused) prediction heads.

    data: (N, 7) = [batch_id, x, y, z, value, cluster_id, shape]
    """
    # TODO(synk): DBSCAN fragmentation, on-the-fly cluster formation and group
    # post-processing (node_assignment_score_batch) are data-dependent/ragged
    # host algorithms with no clean Pallas equivalent; clusters and the graph
    # are built as glue outside the kernels.
    coords = data[:, 1:4]
    values = data[:, 4]

    node_raw, cent = node_encoder(coords, values, clust_ids, num_clusters)
    edge_raw = edge_encoder(node_raw, cent, edge_index)
    glob_raw = global_encoder(node_raw, node_batch, num_batches)

    out = gnn_forward(params, node_raw, edge_raw, glob_raw, edge_index, node_batch)

    return {
        "clusts": clust_ids,
        "edge_index": edge_index,
        "node_features": out["node_features"],      # bf16 (logits are f32)
        "edge_features": out["edge_features"],
        "global_features": out["global_features"],
        "node_pred": out["node_pred"],
        "edge_pred": out["edge_pred"],
        "global_pred": out["global_pred"],
    }


# One compiled program for the whole encoder -> GNN -> heads chain.
grappa_forward_jit = jax.jit(grappa_forward,
                             static_argnames=("num_clusters", "num_batches"))


# ----------------------------------------------------------------------------
# Main
# ----------------------------------------------------------------------------

if __name__ == "__main__":
    key = jax.random.PRNGKey(0)

    B = 2                  # batch size (images)
    CLUST_PER_BATCH = 12   # clusters per image
    VOX_PER_CLUST = 20     # voxels per cluster
    C = B * CLUST_PER_BATCH
    N = C * VOX_PER_CLUST

    k1, k2, k3 = jax.random.split(key, 3)
    centers = jax.random.uniform(k1, (C, 3), minval=2.0, maxval=14.0)
    clust_ids = jnp.repeat(jnp.arange(C, dtype=jnp.int32), VOX_PER_CLUST)
    batch_ids = (clust_ids // CLUST_PER_BATCH).astype(jnp.int32)
    coords = centers[clust_ids] + 0.5 * jax.random.normal(k2, (N, 3))
    values = jax.random.uniform(k3, (N,), minval=0.1, maxval=1.0)
    shapes = (clust_ids % 5).astype(jnp.float32)

    # data: (N, 1 + D + N_f) voxel tensor  [batch_id, x, y, z, value, cluster_id, shape]
    data = jnp.concatenate(
        [batch_ids[:, None].astype(jnp.float32), coords, values[:, None],
         clust_ids[:, None].astype(jnp.float32), shapes[:, None]], axis=1)

    # Graph construction (complete directed graph within each image) — host glue.
    clust_batch = np.arange(C) // CLUST_PER_BATCH
    edges = []
    for b in range(B):
        idx = np.where(clust_batch == b)[0]
        for i in idx:
            for j in idx:
                if i != j:
                    edges.append((i, j))
    edge_index = jnp.asarray(np.array(edges, dtype=np.int32))           # (E, 2)
    node_batch = jnp.asarray(clust_batch.astype(np.int32))              # (C,)

    params = init_grappa_params(jax.random.PRNGKey(42))

    result = grappa_forward_jit(params, data, edge_index, clust_ids, node_batch,
                                num_clusters=C, num_batches=B)
    jax.block_until_ready(result["node_pred"])
    jax.block_until_ready(result["edge_pred"])
    jax.block_until_ready(result["global_pred"])

    assert result["node_pred"].shape == (C, N_NODE_CLASSES)
    assert result["edge_pred"].shape == (edge_index.shape[0], N_EDGE_CLASSES)
    assert result["global_pred"].shape == (B, N_GLOB_CLASSES)
    assert result["node_features"].shape == (C, NODE_FEAT)
    assert result["edge_features"].shape == (edge_index.shape[0], EDGE_FEAT)
    assert bool(jnp.all(jnp.isfinite(result["node_pred"])))
    assert bool(jnp.all(jnp.isfinite(result["edge_pred"])))
    assert bool(jnp.all(jnp.isfinite(result["global_pred"])))
    print("KERNEL_OK")
</pallas_src>

<mosaic_0001>
module attributes {stable_mosaic.version = 11 : i64} {
  func.func private @main(%arg0: i32) attributes {dimension_semantics = [#tpu.dimension_semantics<core_parallel>], iteration_bounds = array<i64: 2>, tpu.core_type = #tpu.core_type<sc_scalar_subcore>, window_params = []} {
    return
  }
}

module attributes {stable_mosaic.version = 11 : i64} {
  func.func private @main(%arg0: i32) attributes {dimension_semantics = [#tpu.dimension_semantics<core_parallel>], iteration_bounds = array<i64: 2>, tpu.core_type = #tpu.core_type<sc_scalar_subcore>, window_params = []} {
    return
  }
}

module attributes {stable_mosaic.version = 11 : i64} {
  func.func @_mlp2_head_kernel(%arg0: i32, %arg1: memref<128x128xbf16, #tpu.memory_space<vmem>>, %arg2: memref<128x128xbf16, #tpu.memory_space<vmem>>, %arg3: memref<1x128xf32, #tpu.memory_space<vmem>>, %arg4: memref<128x128xbf16, #tpu.memory_space<vmem>>, %arg5: memref<1x128xf32, #tpu.memory_space<vmem>>, %arg6: memref<128x128xbf16, #tpu.memory_space<vmem>>, %arg7: memref<1x128xf32, #tpu.memory_space<vmem>>, %arg8: memref<128x128xbf16, #tpu.memory_space<vmem>>) attributes {dimension_semantics = [#tpu.dimension_semantics<parallel>], iteration_bounds = array<i64: 3>, scalar_prefetch = 0 : i64, scratch_operands = 0 : i64, tpu.core_type = #tpu.core_type<tc>, window_params = [{transform_indices = @transform_0, window_bounds = array<i64: 128, 128>}, {pipeline_mode = #tpu.pipeline_mode<synchronous>, transform_indices = @transform_1, window_bounds = array<i64: 128, 128>}, {pipeline_mode = #tpu.pipeline_mode<synchronous>, transform_indices = @transform_2, window_bounds = array<i64: 1, 128>}, {pipeline_mode = #tpu.pipeline_mode<synchronous>, transform_indices = @transform_3, window_bounds = array<i64: 128, 128>}, {pipeline_mode = #tpu.pipeline_mode<synchronous>, transform_indices = @transform_4, window_bounds = array<i64: 1, 128>}, {pipeline_mode = #tpu.pipeline_mode<synchronous>, transform_indices = @transform_5, window_bounds = array<i64: 128, 128>}, {pipeline_mode = #tpu.pipeline_mode<synchronous>, transform_indices = @transform_6, window_bounds = array<i64: 1, 128>}, {transform_indices = @transform_7, window_bounds = array<i64: 128, 128>}]} {
    %c0 = arith.constant 0 : index
    %c0_0 = arith.constant 0 : index
    %0 = vector.load %arg1[%c0, %c0_0] : memref<128x128xbf16, #tpu.memory_space<vmem>>, vector<128x128xbf16>
    %c0_1 = arith.constant 0 : index
    %c0_2 = arith.constant 0 : index
    %1 = vector.load %arg2[%c0_1, %c0_2] : memref<128x128xbf16, #tpu.memory_space<vmem>>, vector<128x128xbf16>
    %cst = arith.constant dense<0.000000e+00> : vector<128x128xf32>
    %2 = tpu.matmul %0, %1, %cst {dimension_numbers = #tpu.dot_dimension_numbers<[1], [0], [0], [1], [0, 0, 1, 1], [], []>} : vector<128x128xbf16>, vector<128x128xbf16>, vector<128x128xf32> -> vector<128x128xf32>
    %c0_3 = arith.constant 0 : index
    %c0_4 = arith.constant 0 : index
    %3 = vector.load %arg3[%c0_3, %c0_4] : memref<1x128xf32, #tpu.memory_space<vmem>>, vector<1x128xf32>
    %4 = vector.broadcast %3 : vector<1x128xf32> to vector<128x128xf32>
    %5 = arith.addf %2, %4 : vector<128x128xf32>
    %cst_5 = arith.constant 0.000000e+00 : f32
    %6 = vector.broadcast %cst_5 : f32 to vector<128x128xf32>
    %7 = arith.maximumf %5, %6 : vector<128x128xf32>
    %8 = arith.truncf %7 : vector<128x128xf32> to vector<128x128xbf16>
    %c0_6 = arith.constant 0 : index
    %c0_7 = arith.constant 0 : index
    %9 = vector.load %arg4[%c0_6, %c0_7] : memref<128x128xbf16, #tpu.memory_space<vmem>>, vector<128x128xbf16>
    %cst_8 = arith.constant dense<0.000000e+00> : vector<128x128xf32>
    %10 = tpu.matmul %8, %9, %cst_8 {dimension_numbers = #tpu.dot_dimension_numbers<[1], [0], [0], [1], [0, 0, 1, 1], [], []>} : vector<128x128xbf16>, vector<128x128xbf16>, vector<128x128xf32> -> vector<128x128xf32>
    %c0_9 = arith.constant 0 : index
    %c0_10 = arith.constant 0 : index
    %11 = vector.load %arg5[%c0_9, %c0_10] : memref<1x128xf32, #tpu.memory_space<vmem>>, vector<1x128xf32>
    %12 = vector.broadcast %11 : vector<1x128xf32> to vector<128x128xf32>
    %13 = arith.addf %10, %12 : vector<128x128xf32>
    %cst_11 = arith.constant 0.000000e+00 : f32
    %14 = vector.broadcast %cst_11 : f32 to vector<128x128xf32>
    %15 = arith.maximumf %13, %14 : vector<128x128xf32>
    %16 = arith.truncf %15 : vector<128x128xf32> to vector<128x128xbf16>
    %c0_12 = arith.constant 0 : index
    %c0_13 = arith.constant 0 : index
    %17 = vector.load %arg6[%c0_12, %c0_13] : memref<128x128xbf16, #tpu.memory_space<vmem>>, vector<128x128xbf16>
    %cst_14 = arith.constant dense<0.000000e+00> : vector<128x128xf32>
    %18 = tpu.matmul %16, %17, %cst_14 {dimension_numbers = #tpu.dot_dimension_numbers<[1], [0], [0], [1], [0, 0, 1, 1], [], []>} : vector<128x128xbf16>, vector<128x128xbf16>, vector<128x128xf32> -> vector<128x128xf32>
    %c0_15 = arith.constant 0 : index
    %c0_16 = arith.constant 0 : index
    %19 = vector.load %arg7[%c0_15, %c0_16] : memref<1x128xf32, #tpu.memory_space<vmem>>, vector<1x128xf32>
    %20 = vector.broadcast %19 : vector<1x128xf32> to vector<128x128xf32>
    %21 = arith.addf %18, %20 : vector<128x128xf32>
    %22 = arith.addf %15, %21 : vector<128x128xf32>
    %23 = arith.truncf %22 : vector<128x128xf32> to vector<128x128xbf16>
    %c0_17 = arith.constant 0 : index
    %c0_18 = arith.constant 0 : index
    %24 = vector.load %arg8[%c0_17, %c0_18] : memref<128x128xbf16, #tpu.memory_space<vmem>>, vector<128x128xbf16>
    tpu.vector_store %arg8[%c0_17, %c0_18], %23 {strides = array<i32>} : memref<128x128xbf16, #tpu.memory_space<vmem>>, vector<128x128xbf16>,
    return
  }
  func.func @transform_0(%arg0: i32) -> (i32, i32) {
    %c0_i32 = arith.constant 0 : i32
    %c0_i32_0 = arith.constant 0 : i32
    return %arg0, %c0_i32 : i32, i32
  }
  func.func @transform_1(%arg0: i32) -> (i32, i32) {
    %c0_i32 = arith.constant 0 : i32
    %c0_i32_0 = arith.constant 0 : i32
    %c0_i32_1 = arith.constant 0 : i32
    return %c0_i32, %c0_i32_0 : i32, i32
  }
  func.func @transform_2(%arg0: i32) -> (i32, i32) {
    %c0_i32 = arith.constant 0 : i32
    %c0_i32_0 = arith.constant 0 : i32
    %c0_i32_1 = arith.constant 0 : i32
    return %c0_i32, %c0_i32_0 : i32, i32
  }
  func.func @transform_3(%arg0: i32) -> (i32, i32) {
    %c0_i32 = arith.constant 0 : i32
    %c0_i32_0 = arith.constant 0 : i32
    %c0_i32_1 = arith.constant 0 : i32
    return %c0_i32, %c0_i32_0 : i32, i32
  }
  func.func @transform_4(%arg0: i32) -> (i32, i32) {
    %c0_i32 = arith.constant 0 : i32
    %c0_i32_0 = arith.constant 0 : i32
    %c0_i32_1 = arith.constant 0 : i32
    return %c0_i32, %c0_i32_0 : i32, i32
  }
  func.func @transform_5(%arg0: i32) -> (i32, i32) {
    %c0_i32 = arith.constant 0 : i32
    %c0_i32_0 = arith.constant 0 : i32
    %c0_i32_1 = arith.constant 0 : i32
    return %c0_i32, %c0_i32_0 : i32, i32
  }
  func.func @transform_6(%arg0: i32) -> (i32, i32) {
    %c0_i32 = arith.constant 0 : i32
    %c0_i32_0 = arith.constant 0 : i32
    %c0_i32_1 = arith.constant 0 : i32
    return %c0_i32, %c0_i32_0 : i32, i32
  }
  func.func @transform_7(%arg0: i32) -> (i32, i32) {
    %c0_i32 = arith.constant 0 : i32
    %c0_i32_0 = arith.constant 0 : i32
    return %arg0, %c0_i32 : i32, i32
  }
}

module attributes {stable_mosaic.version = 11 : i64} {
  func.func @_mlp2_head_kernel(%arg0: i32, %arg1: memref<32x128xbf16, #tpu.memory_space<vmem>>, %arg2: memref<128x128xbf16, #tpu.memory_space<vmem>>, %arg3: memref<1x128xf32, #tpu.memory_space<vmem>>, %arg4: memref<128x128xbf16, #tpu.memory_space<vmem>>, %arg5: memref<1x128xf32, #tpu.memory_space<vmem>>, %arg6: memref<128x128xbf16, #tpu.memory_space<vmem>>, %arg7: memref<1x128xf32, #tpu.memory_space<vmem>>, %arg8: memref<32x128xbf16, #tpu.memory_space<vmem>>) attributes {dimension_semantics = [#tpu.dimension_semantics<parallel>], iteration_bounds = array<i64: 1>, scalar_prefetch = 0 : i64, scratch_operands = 0 : i64, tpu.core_type = #tpu.core_type<tc>, window_params = [{transform_indices = @transform_0, window_bounds = array<i64: 32, 128>}, {pipeline_mode = #tpu.pipeline_mode<synchronous>, transform_indices = @transform_1, window_bounds = array<i64: 128, 128>}, {pipeline_mode = #tpu.pipeline_mode<synchronous>, transform_indices = @transform_2, window_bounds = array<i64: 1, 128>}, {pipeline_mode = #tpu.pipeline_mode<synchronous>, transform_indices = @transform_3, window_bounds = array<i64: 128, 128>}, {pipeline_mode = #tpu.pipeline_mode<synchronous>, transform_indices = @transform_4, window_bounds = array<i64: 1, 128>}, {pipeline_mode = #tpu.pipeline_mode<synchronous>, transform_indices = @transform_5, window_bounds = array<i64: 128, 128>}, {pipeline_mode = #tpu.pipeline_mode<synchronous>, transform_indices = @transform_6, window_bounds = array<i64: 1, 128>}, {transform_indices = @transform_7, window_bounds = array<i64: 32, 128>}]} {
    %c0 = arith.constant 0 : index
    %c0_0 = arith.constant 0 : index
    %0 = vector.load %arg1[%c0, %c0_0] : memref<32x128xbf16, #tpu.memory_space<vmem>>, vector<32x128xbf16>
    %c0_1 = arith.constant 0 : index
    %c0_2 = arith.constant 0 : index
    %1 = vector.load %arg2[%c0_1, %c0_2] : memref<128x128xbf16, #tpu.memory_space<vmem>>, vector<128x128xbf16>
    %cst = arith.constant dense<0.000000e+00> : vector<32x128xf32>
    %2 = tpu.matmul %0, %1, %cst {dimension_numbers = #tpu.dot_dimension_numbers<[1], [0], [0], [1], [0, 0, 1, 1], [], []>} : vector<32x128xbf16>, vector<128x128xbf16>, vector<32x128xf32> -> vector<32x128xf32>
    %c0_3 = arith.constant 0 : index
    %c0_4 = arith.constant 0 : index
    %3 = vector.load %arg3[%c0_3, %c0_4] : memref<1x128xf32, #tpu.memory_space<vmem>>, vector<1x128xf32>
    %4 = vector.broadcast %3 : vector<1x128xf32> to vector<32x128xf32>
    %5 = arith.addf %2, %4 : vector<32x128xf32>
    %cst_5 = arith.constant 0.000000e+00 : f32
    %6 = vector.broadcast %cst_5 : f32 to vector<32x128xf32>
    %7 = arith.maximumf %5, %6 : vector<32x128xf32>
    %8 = arith.truncf %7 : vector<32x128xf32> to vector<32x128xbf16>
    %c0_6 = arith.constant 0 : index
    %c0_7 = arith.constant 0 : index
    %9 = vector.load %arg4[%c0_6, %c0_7] : memref<128x128xbf16, #tpu.memory_space<vmem>>, vector<128x128xbf16>
    %cst_8 = arith.constant dense<0.000000e+00> : vector<32x128xf32>
    %10 = tpu.matmul %8, %9, %cst_8 {dimension_numbers = #tpu.dot_dimension_numbers<[1], [0], [0], [1], [0, 0, 1, 1], [], []>} : vector<32x128xbf16>, vector<128x128xbf16>, vector<32x128xf32> -> vector<32x128xf32>
    %c0_9 = arith.constant 0 : index
    %c0_10 = arith.constant 0 : index
    %11 = vector.load %arg5[%c0_9, %c0_10] : memref<1x128xf32, #tpu.memory_space<vmem>>, vector<1x128xf32>
    %12 = vector.broadcast %11 : vector<1x128xf32> to vector<32x128xf32>
    %13 = arith.addf %10, %12 : vector<32x128xf32>
    %cst_11 = arith.constant 0.000000e+00 : f32
    %14 = vector.broadcast %cst_11 : f32 to vector<32x128xf32>
    %15 = arith.maximumf %13, %14 : vector<32x128xf32>
    %16 = arith.truncf %15 : vector<32x128xf32> to vector<32x128xbf16>
    %c0_12 = arith.constant 0 : index
    %c0_13 = arith.constant 0 : index
    %17 = vector.load %arg6[%c0_12, %c0_13] : memref<128x128xbf16, #tpu.memory_space<vmem>>, vector<128x128xbf16>
    %cst_14 = arith.constant dense<0.000000e+00> : vector<32x128xf32>
    %18 = tpu.matmul %16, %17, %cst_14 {dimension_numbers = #tpu.dot_dimension_numbers<[1], [0], [0], [1], [0, 0, 1, 1], [], []>} : vector<32x128xbf16>, vector<128x128xbf16>, vector<32x128xf32> -> vector<32x128xf32>
    %c0_15 = arith.constant 0 : index
    %c0_16 = arith.constant 0 : index
    %19 = vector.load %arg7[%c0_15, %c0_16] : memref<1x128xf32, #tpu.memory_space<vmem>>, vector<1x128xf32>
    %20 = vector.broadcast %19 : vector<1x128xf32> to vector<32x128xf32>
    %21 = arith.addf %18, %20 : vector<32x128xf32>
    %22 = arith.addf %15, %21 : vector<32x128xf32>
    %23 = arith.truncf %22 : vector<32x128xf32> to vector<32x128xbf16>
    %c0_17 = arith.constant 0 : index
    %c0_18 = arith.constant 0 : index
    %24 = vector.load %arg8[%c0_17, %c0_18] : memref<32x128xbf16, #tpu.memory_space<vmem>>, vector<32x128xbf16>
    tpu.vector_store %arg8[%c0_17, %c0_18], %23 {strides = array<i32>} : memref<32x128xbf16, #tpu.memory_space<vmem>>, vector<32x128xbf16>,
    return
  }
  func.func @transform_0(%arg0: i32) -> (i32, i32) {
    %c0_i32 = arith.constant 0 : i32
    %c0_i32_0 = arith.constant 0 : i32
    return %arg0, %c0_i32 : i32, i32
  }
  func.func @transform_1(%arg0: i32) -> (i32, i32) {
    %c0_i32 = arith.constant 0 : i32
    %c0_i32_0 = arith.constant 0 : i32
    %c0_i32_1 = arith.constant 0 : i32
    return %c0_i32, %c0_i32_0 : i32, i32
  }
  func.func @transform_2(%arg0: i32) -> (i32, i32) {
    %c0_i32 = arith.constant 0 : i32
    %c0_i32_0 = arith.constant 0 : i32
    %c0_i32_1 = arith.constant 0 : i32
    return %c0_i32, %c0_i32_0 : i32, i32
  }
  func.func @transform_3(%arg0: i32) -> (i32, i32) {
    %c0_i32 = arith.constant 0 : i32
    %c0_i32_0 = arith.constant 0 : i32
    %c0_i32_1 = arith.constant 0 : i32
    return %c0_i32, %c0_i32_0 : i32, i32
  }
  func.func @transform_4(%arg0: i32) -> (i32, i32) {
    %c0_i32 = arith.constant 0 : i32
    %c0_i32_0 = arith.constant 0 : i32
    %c0_i32_1 = arith.constant 0 : i32
    return %c0_i32, %c0_i32_0 : i32, i32
  }
  func.func @transform_5(%arg0: i32) -> (i32, i32) {
    %c0_i32 = arith.constant 0 : i32
    %c0_i32_0 = arith.constant 0 : i32
    %c0_i32_1 = arith.constant 0 : i32
    return %c0_i32, %c0_i32_0 : i32, i32
  }
  func.func @transform_6(%arg0: i32) -> (i32, i32) {
    %c0_i32 = arith.constant 0 : i32
    %c0_i32_0 = arith.constant 0 : i32
    %c0_i32_1 = arith.constant 0 : i32
    return %c0_i32, %c0_i32_0 : i32, i32
  }
  func.func @transform_7(%arg0: i32) -> (i32, i32) {
    %c0_i32 = arith.constant 0 : i32
    %c0_i32_0 = arith.constant 0 : i32
    return %arg0, %c0_i32 : i32, i32
  }
}

</mosaic_0001>

<llo_original>
// kernel: grappa_forward.2
$region0: #{grappa_forward.2}
  #allocation0 [shape = 'u32[]', space=smem, size = 0x4, offset = 0x4, fixed_abs, tag = 'smem constant byte address 0x4 - core index']
  #allocation1 [shape = 'u32[144,128]{1,0:T(1,128)}', space=vmem, size = 0x12000, scoped, tag = 'internal scratch']
  %s0 = inlined_call_operand.vmem [shape: bf16[384,128], index: 0, kind: input, shape index: {}]
  %s1 = inlined_call_operand.vmem [shape: bf16[128,128], index: 1, kind: input, shape index: {}]
  %s2 = inlined_call_operand.vmem [shape: f32[1,128], index: 2, kind: input, shape index: {}]
  %s3 = inlined_call_operand.vmem [shape: bf16[128,128], index: 3, kind: input, shape index: {}]
  %s4 = inlined_call_operand.vmem [shape: f32[1,128], index: 4, kind: input, shape index: {}]
  %s5 = inlined_call_operand.vmem [shape: bf16[128,128], index: 5, kind: input, shape index: {}]
  %s6 = inlined_call_operand.vmem [shape: f32[1,128], index: 6, kind: input, shape index: {}]
  %s7 = inlined_call_operand.vmem [shape: bf16[384,128], index: 7, kind: output, shape index: {}]
  %s8 = sld [smem:[#allocation0]]
  $region61: #{grappa_forward.2} parent=0
    _
  %s10 = ssub.s32 1, %s8
  %s11 = scalar_select 0, %s10, %s8
  loop: start=0, step=1, limit=5
  $region2: #{grappa_forward.2} parent=0 // loop_pre_header
    _
  $region3: #{grappa_forward.2} parent=0 // loop_header
    %s13 = sphi 0, %s17
    %p14 = scmp.ge.s32.totalorder %s13, 5
    %s23 = sphi 0, %s25
    %s26 = sphi 0, %s23
    %s27 = sphi 0, %s26
    %s43 = sphi 0, %s27
    %s47 = sphi 0, %s47
    %s49 = sphi 0, %s47
    %s50 = sphi 0, %s49
    %s64 = sphi 0, %s50
    %s68 = sphi 0, %s68
    %s70 = sphi 0, %s68
    %s71 = sphi 0, %s70
    %s85 = sphi 0, %s71
    %s89 = sphi 0, %s89
    %s91 = sphi 0, %s89
    %s92 = sphi 0, %s91
    %s106 = sphi 0, %s92
    %s110 = sphi 0, %s110
    %s112 = sphi 0, %s110
    %s113 = sphi 0, %s112
    %s127 = sphi 0, %s113
    %s131 = sphi 0, %s131
    %s133 = sphi 0, %s131
    %s134 = sphi 0, %s133
    %s148 = sphi 0, %s134
    %s152 = sphi 0, %s152
    %s154 = sphi 0, %s152
    %s155 = sphi 0, %s154
    %s169 = sphi 0, %s155
    %s175 = sphi 0, %s177
    %s178 = sphi 0, %s175
    %s179 = sphi 0, %s178
    %s195 = sphi 0, %s179
  $region4: #{grappa_forward.2} parent=0 // loop_header_branch
    %16 = sbr.rel (%p14) target = $region8
  $region5: #{grappa_forward.2} parent=0 // loop_body
    %s18 = ssub.s32 %s13, 1
    %s19 = ssub.s32 %s13, 2
    %s20 = sadd.s32 %s13, 1
    %s21 = ssub.s32 %s13, %s20
    %p22 = scmp.eq.s32.totalorder %s21, 0
    %s24 = sadd.s32 %s23, 1
    %s25 = scalar_select %p22, %s23, %s24
    %p28 = pneg %p22
    %p29 = scmp.eq.s32.totalorder %s13, 2
    %p30 = por %p28, %p29
    %p31 = scmp.ne.s32.totalorder %s23, %s26
    %p32 = scmp.eq.s32.totalorder %s13, 0
    %p33 = por %p31, %p32
    %p34 = scmp.ne.s32.totalorder %s23, %s26
    %p35 = scmp.eq.s32.totalorder %s18, 2
    %p36 = por %p34, %p35
    %p37 = scmp.ne.s32.totalorder %s26, %s27
    %p38 = scmp.eq.s32.totalorder %s18, 0
    %p39 = por %p37, %p38
    %p40 = scmp.ne.s32.totalorder %s26, %s27
    %p41 = scmp.eq.s32.totalorder %s19, 2
    %p42 = por %p40, %p41
    %p44 = scmp.ne.s32.totalorder %s27, %s43
    %p45 = scmp.eq.s32.totalorder %s19, 0
    %p46 = por %p44, %p45
    %s48 = sadd.s32 %s47, 1
    %p51 = scmp.eq.s32.totalorder %s13, 2
    %p52 = scmp.ne.s32.totalorder %s47, %s49
    %p53 = scmp.eq.s32.totalorder %s13, 0
    %p54 = por %p52, %p53
    %p55 = scmp.ne.s32.totalorder %s47, %s49
    %p56 = scmp.eq.s32.totalorder %s18, 2
    %p57 = por %p55, %p56
    %p58 = scmp.ne.s32.totalorder %s49, %s50
    %p59 = scmp.eq.s32.totalorder %s18, 0
    %p60 = por %p58, %p59
    %p61 = scmp.ne.s32.totalorder %s49, %s50
    %p62 = scmp.eq.s32.totalorder %s19, 2
    %p63 = por %p61, %p62
    %p65 = scmp.ne.s32.totalorder %s50, %s64
    %p66 = scmp.eq.s32.totalorder %s19, 0
    %p67 = por %p65, %p66
    %s69 = sadd.s32 %s68, 1
    %p72 = scmp.eq.s32.totalorder %s13, 2
    %p73 = scmp.ne.s32.totalorder %s68, %s70
    %p74 = scmp.eq.s32.totalorder %s13, 0
    %p75 = por %p73, %p74
    %p76 = scmp.ne.s32.totalorder %s68, %s70
    %p77 = scmp.eq.s32.totalorder %s18, 2
    %p78 = por %p76, %p77
    %p79 = scmp.ne.s32.totalorder %s70, %s71
    %p80 = scmp.eq.s32.totalorder %s18, 0
    %p81 = por %p79, %p80
    %p82 = scmp.ne.s32.totalorder %s70, %s71
    %p83 = scmp.eq.s32.totalorder %s19, 2
    %p84 = por %p82, %p83
    %p86 = scmp.ne.s32.totalorder %s71, %s85
    %p87 = scmp.eq.s32.totalorder %s19, 0
    %p88 = por %p86, %p87
    %s90 = sadd.s32 %s89, 1
    %p93 = scmp.eq.s32.totalorder %s13, 2
    %p94 = scmp.ne.s32.totalorder %s89, %s91
    %p95 = scmp.eq.s32.totalorder %s13, 0
    %p96 = por %p94, %p95
    %p97 = scmp.ne.s32.totalorder %s89, %s91
    %p98 = scmp.eq.s32.totalorder %s18, 2
    %p99 = por %p97, %p98
    %p100 = scmp.ne.s32.totalorder %s91, %s92
    %p101 = scmp.eq.s32.totalorder %s18, 0
    %p102 = por %p100, %p101
    %p103 = scmp.ne.s32.totalorder %s91, %s92
    %p104 = scmp.eq.s32.totalorder %s19, 2
    %p105 = por %p103, %p104
    %p107 = scmp.ne.s32.totalorder %s92, %s106
    %p108 = scmp.eq.s32.totalorder %s19, 0
    %p109 = por %p107, %p108
    %s111 = sadd.s32 %s110, 1
    %p114 = scmp.eq.s32.totalorder %s13, 2
    %p115 = scmp.ne.s32.totalorder %s110, %s112
    %p116 = scmp.eq.s32.totalorder %s13, 0
    %p117 = por %p115, %p116
    %p118 = scmp.ne.s32.totalorder %s110, %s112
    %p119 = scmp.eq.s32.totalorder %s18, 2
    %p120 = por %p118, %p119
    %p121 = scmp.ne.s32.totalorder %s112, %s113
    %p122 = scmp.eq.s32.totalorder %s18, 0
    %p123 = por %p121, %p122
    %p124 = scmp.ne.s32.totalorder %s112, %s113
    %p125 = scmp.eq.s32.totalorder %s19, 2
    %p126 = por %p124, %p125
    %p128 = scmp.ne.s32.totalorder %s113, %s127
    %p129 = scmp.eq.s32.totalorder %s19, 0
    %p130 = por %p128, %p129
    %s132 = sadd.s32 %s131, 1
    %p135 = scmp.eq.s32.totalorder %s13, 2
    %p136 = scmp.ne.s32.totalorder %s131, %s133
    %p137 = scmp.eq.s32.totalorder %s13, 0
    %p138 = por %p136, %p137
    %p139 = scmp.ne.s32.totalorder %s131, %s133
    %p140 = scmp.eq.s32.totalorder %s18, 2
    %p141 = por %p139, %p140
    %p142 = scmp.ne.s32.totalorder %s133, %s134
    %p143 = scmp.eq.s32.totalorder %s18, 0
    %p144 = por %p142, %p143
    %p145 = scmp.ne.s32.totalorder %s133, %s134
    %p146 = scmp.eq.s32.totalorder %s19, 2
    %p147 = por %p145, %p146
    %p149 = scmp.ne.s32.totalorder %s134, %s148
    %p150 = scmp.eq.s32.totalorder %s19, 0
    %p151 = por %p149, %p150
    %s153 = sadd.s32 %s152, 1
    %p156 = scmp.eq.s32.totalorder %s13, 2
    %p157 = scmp.ne.s32.totalorder %s152, %s154
    %p158 = scmp.eq.s32.totalorder %s13, 0
    %p159 = por %p157, %p158
    %p160 = scmp.ne.s32.totalorder %s152, %s154
    %p161 = scmp.eq.s32.totalorder %s18, 2
    %p162 = por %p160, %p161
    %p163 = scmp.ne.s32.totalorder %s154, %s155
    %p164 = scmp.eq.s32.totalorder %s18, 0
    %p165 = por %p163, %p164
    %p166 = scmp.ne.s32.totalorder %s154, %s155
    %p167 = scmp.eq.s32.totalorder %s19, 2
    %p168 = por %p166, %p167
    %p170 = scmp.ne.s32.totalorder %s155, %s169
    %p171 = scmp.eq.s32.totalorder %s19, 0
    %p172 = por %p170, %p171
    %s173 = ssub.s32 %s13, %s20
    %p174 = scmp.eq.s32.totalorder %s173, 0
    %s176 = sadd.s32 %s175, 1
    %s177 = scalar_select %p174, %s175, %s176
    %p180 = pneg %p174
    %p181 = scmp.eq.s32.totalorder %s13, 2
    %p182 = por %p180, %p181
    %p183 = scmp.ne.s32.totalorder %s175, %s178
    %p184 = scmp.eq.s32.totalorder %s13, 0
    %p185 = por %p183, %p184
    %p186 = scmp.ne.s32.totalorder %s175, %s178
    %p187 = scmp.eq.s32.totalorder %s18, 2
    %p188 = por %p186, %p187
    %p189 = scmp.ne.s32.totalorder %s178, %s179
    %p190 = scmp.eq.s32.totalorder %s18, 0
    %p191 = por %p189, %p190
    %p192 = scmp.ne.s32.totalorder %s178, %s179
    %p193 = scmp.eq.s32.totalorder %s19, 2
    %p194 = por %p192, %p193
    %p196 = scmp.ne.s32.totalorder %s179, %s195
    %p197 = scmp.eq.s32.totalorder %s19, 0
    %p198 = por %p196, %p197
    %p199 = scmp.le.s32.totalorder 1, %s13
    %p200 = scmp.lt.s32.totalorder %s13, 4
    %p201 = pnand %p199, %p200
    %p202 = pneg %p201
    // Predicated region
    $region9: #{grappa_forward.2} parent=5 // pred_check
      _
    $region10: #{grappa_forward.2} parent=5 // pred_check_branch
      %204 = sbr.rel (%p201) target = $region12
    $region11: #{grappa_forward.2} parent=5 // pred_region
      %s205 = ssub.s32 %s13, 1
      // Predicated region
      $region13: #{grappa_forward.2} parent=11 // pred_check
        %p206 = pneg %p60
      $region14: #{grappa_forward.2} parent=11 // pred_check_branch
        %208 = sbr.rel (%p206) target = $region16
      $region15: #{grappa_forward.2} parent=11 // pred_region
        _
      $region16: #{grappa_forward.2} parent=11 // pred_fallthru
        _
      // Predicated region
      $region17: #{grappa_forward.2} parent=11 // pred_check
        %p209 = pneg %p81
      $region18: #{grappa_forward.2} parent=11 // pred_check_branch
        %211 = sbr.rel (%p209) target = $region20
      $region19: #{grappa_forward.2} parent=11 // pred_region
        _
      $region20: #{grappa_forward.2} parent=11 // pred_fallthru
        _
      // Predicated region
      $region21: #{grappa_forward.2} parent=11 // pred_check
        %p212 = pneg %p102
      $region22: #{grappa_forward.2} parent=11 // pred_check_branch
        %214 = sbr.rel (%p212) target = $region24
      $region23: #{grappa_forward.2} parent=11 // pred_region
        _
      $region24: #{grappa_forward.2} parent=11 // pred_fallthru
        _
      // Predicated region
      $region25: #{grappa_forward.2} parent=11 // pred_check
        %p215 = pneg %p123
      $region26: #{grappa_forward.2} parent=11 // pred_check_branch
        %217 = sbr.rel (%p215) target = $region28
      $region27: #{grappa_forward.2} parent=11 // pred_region
        _
      $region28: #{grappa_forward.2} parent=11 // pred_fallthru
        _
      // Predicated region
      $region29: #{grappa_forward.2} parent=11 // pred_check
        %p218 = pneg %p144
      $region30: #{grappa_forward.2} parent=11 // pred_check_branch
        %220 = sbr.rel (%p218) target = $region32
      $region31: #{grappa_forward.2} parent=11 // pred_region
        _
      $region32: #{grappa_forward.2} parent=11 // pred_fallthru
        _
      // Predicated region
      $region33: #{grappa_forward.2} parent=11 // pred_check
        %p221 = pneg %p165
      $region34: #{grappa_forward.2} parent=11 // pred_check_branch
        %223 = sbr.rel (%p221) target = $region36
      $region35: #{grappa_forward.2} parent=11 // pred_region
        _
      $region36: #{grappa_forward.2} parent=11 // pred_fallthru
        _
    $region12: #{grappa_forward.2} parent=5 // pred_fallthru
      _
    %p224 = scmp.lt.s32.totalorder %s13, 3
    // Predicated region
    $region37: #{grappa_forward.2} parent=5 // pred_check
      %p225 = pneg %p224
    $region38: #{grappa_forward.2} parent=5 // pred_check_branch
      %227 = sbr.rel (%p225) target = $region40
    $region39: #{grappa_forward.2} parent=5 // pred_region
      // Predicated region
      $region41: #{grappa_forward.2} parent=39 // pred_check
        %p228 = pneg %p33
      $region42: #{grappa_forward.2} parent=39 // pred_check_branch
        %230 = sbr.rel (%p228) target = $region44
      $region43: #{grappa_forward.2} parent=39 // pred_region
        %s231 = smul.u32 16, %s13
        %p232 = scmp.lt.s32.totalorder %s231, 47
        %s233 = scalar_select %p232, %s231, 47
        %s234 = smul.addr %s233, 4
        %s235 = scalar_lea.vmem %s0, %s234
        %s236 = smul.u32 16, %s13
      $region44: #{grappa_forward.2} parent=39 // pred_fallthru
        _
    $region40: #{grappa_forward.2} parent=5 // pred_fallthru
      _
    %p237 = scmp.le.s32.totalorder 1, %s13
    %p238 = scmp.lt.s32.totalorder %s13, 4
    %p239 = pnand %p237, %p238
    %p240 = pneg %p239
    // Predicated region
    $region45: #{grappa_forward.2} parent=5 // pred_check
      _
    $region46: #{grappa_forward.2} parent=5 // pred_check_branch
      %242 = sbr.rel (%p239) target = $region48
    $region47: #{grappa_forward.2} parent=5 // pred_region
      %s243 = ssub.s32 %s13, 1
      %s244 = smul.u32 16, %s18
      %p245 = scmp.lt.s32.totalorder %s244, 47
      %s246 = scalar_select %p245, %s244, 47
      %s247 = smul.addr %s246, 4
      %s248 = scalar_lea.vmem %s0, %s247
      %p249 = pneg %p39
      %p250 = pneg %p36
      %p251 = pneg %p60
      %p252 = pneg %p57
      %p253 = pneg %p81
      %p254 = pneg %p78
      %p255 = pneg %p102
      %p256 = pneg %p99
      %p257 = pneg %p123
      %p258 = pneg %p120
      %p259 = pneg %p144
      %p260 = pneg %p141
      %p261 = pneg %p165
      %p262 = pneg %p162
      %p263 = pneg %p191
      %p264 = pneg %p188
      %s265 = smul.u32 16, %s18
      %p266 = scmp.lt.s32.totalorder %s265, 47
      %s267 = scalar_select %p266, %s265, 47
      %s268 = smul.addr %s267, 4
      %s269 = scalar_lea.vmem %s7, %s268
      %s270 = smul.u32 16, %s18
      %p271 = scmp.lt.s32.totalorder %s270, 47
      %s272 = scalar_select %p271, %s270, 47
      %s273 = smul.addr %s272, 4
      %s274 = scalar_lea.vmem %s0, %s273
      %s275 = smul.u32 16, %s18
      %s276 = smul.u32 16, %s18
      %p277 = scmp.lt.s32.totalorder %s276, 47
      %s278 = scalar_select %p277, %s276, 47
      %s279 = smul.addr %s278, 4
      %s280 = scalar_lea.vmem %s7, %s279
      %s281 = smul.u32 16, %s18
      %v283 = vld [vmem:[%s274] sm:$0xf]
      %v284 = vld [vmem:[%s274 + $0x4] sm:$0xf]
      %v285 = vld [vmem:[%s274 + $0x8] sm:$0xf]
      %v286 = vld [vmem:[%s274 + $0xc] sm:$0xf]
      %v287 = vld [vmem:[%s274 + $0x10] sm:$0xf]
      %v288 = vld [vmem:[%s274 + $0x14] sm:$0xf]
      %v289 = vld [vmem:[%s274 + $0x18] sm:$0xf]
      %v290 = vld [vmem:[%s274 + $0x1c] sm:$0xf]
      %v291 = vld [vmem:[%s274 + $0x20] sm:$0xf]
      %v292 = vld [vmem:[%s274 + $0x24] sm:$0xf]
      %v293 = vld [vmem:[%s274 + $0x28] sm:$0xf]
      %v294 = vld [vmem:[%s274 + $0x2c] sm:$0xf]
      %v295 = vld [vmem:[%s274 + $0x30] sm:$0xf]
      %v296 = vld [vmem:[%s274 + $0x34] sm:$0xf]
      %v297 = vld [vmem:[%s274 + $0x38] sm:$0xf]
      %v298 = vld [vmem:[%s274 + $0x3c] sm:$0xf]
      %v299 = vld [vmem:[%s1] sm:$0xf]
      %v300 = vld [vmem:[%s1 + $0x4] sm:$0xf]
      %v301 = vld [vmem:[%s1 + $0x8] sm:$0xf]
      %v302 = vld [vmem:[%s1 + $0xc] sm:$0xf]
      %v303 = vld [vmem:[%s1 + $0x10] sm:$0xf]
      %v304 = vld [vmem:[%s1 + $0x14] sm:$0xf]
      %v305 = vld [vmem:[%s1 + $0x18] sm:$0xf]
      %v306 = vld [vmem:[%s1 + $0x1c] sm:$0xf]
      %v307 = vld [vmem:[%s1 + $0x20] sm:$0xf]
      %v308 = vld [vmem:[%s1 + $0x24] sm:$0xf]
      %v309 = vld [vmem:[%s1 + $0x28] sm:$0xf]
      %v310 = vld [vmem:[%s1 + $0x2c] sm:$0xf]
      %v311 = vld [vmem:[%s1 + $0x30] sm:$0xf]
      %v312 = vld [vmem:[%s1 + $0x34] sm:$0xf]
      %v313 = vld [vmem:[%s1 + $0x38] sm:$0xf]
      %v314 = vld [vmem:[%s1 + $0x3c] sm:$0xf]
      %v315 = vld [vmem:[%s2] sm:$0x1]
      %v317 = vlaneseq
      %v318 = vshrl.u32 %v317, 7
      %v319 = vsub.s32 0, %v318
      %v320 = vrot.slane %v315, %v319
      %v338 = vunpack.c.l.b16 %v283
      %v339 = vunpack.c.l.b16 %v284
      %v340 = vunpack.c.l.b16 %v285
      %v341 = vunpack.c.l.b16 %v286
      %v342 = vunpack.c.l.b16 %v287
      %v343 = vunpack.c.l.b16 %v288
      %v344 = vunpack.c.l.b16 %v289
      %v345 = vunpack.c.l.b16 %v290
      %v346 = vunpack.c.l.b16 %v291
      %v347 = vunpack.c.l.b16 %v292
      %v348 = vunpack.c.l.b16 %v293
      %v349 = vunpack.c.l.b16 %v294
      %v350 = vunpack.c.l.b16 %v295
      %v351 = vunpack.c.l.b16 %v296
      %v352 = vunpack.c.l.b16 %v297
      %v353 = vunpack.c.l.b16 %v298
      %v354 = vpack.c.b16 %v339, %v338
      %v355 = vpack.c.b16 %v341, %v340
      %v356 = vpack.c.b16 %v343, %v342
      %v357 = vpack.c.b16 %v345, %v344
      %v358 = vpack.c.b16 %v347, %v346
      %v359 = vpack.c.b16 %v349, %v348
      %v360 = vpack.c.b16 %v351, %v350
      %v361 = vpack.c.b16 %v353, %v352
      %v386 = vunpack.c.l.b16 %v299
      %v387 = vunpack.c.l.b16 %v300
      %v388 = vunpack.c.l.b16 %v301
      %v389 = vunpack.c.l.b16 %v302
      %v390 = vunpack.c.l.b16 %v303
      %v391 = vunpack.c.l.b16 %v304
      %v392 = vunpack.c.l.b16 %v305
      %v393 = vunpack.c.l.b16 %v306
      %v394 = vunpack.c.l.b16 %v307
      %v395 = vunpack.c.l.b16 %v308
      %v396 = vunpack.c.l.b16 %v309
      %v397 = vunpack.c.l.b16 %v310
      %v398 = vunpack.c.l.b16 %v311
      %v399 = vunpack.c.l.b16 %v312
      %v400 = vunpack.c.l.b16 %v313
      %v401 = vunpack.c.l.b16 %v314
      %v402 = vpack.c.b16 %v387, %v386
      %v403 = vpack.c.b16 %v389, %v388
      %v404 = vpack.c.b16 %v391, %v390
      %v405 = vpack.c.b16 %v393, %v392
      %v406 = vpack.c.b16 %v395, %v394
      %v407 = vpack.c.b16 %v397, %v396
      %v408 = vpack.c.b16 %v399, %v398
      %v409 = vpack.c.b16 %v401, %v400
      %418 = vmatprep.subr.bf16.mxu0 0
      %419 = vmatpush1.bf16.msra.mxu0 %v402
      %420 = vmatprep.subr.bf16.mxu0 0
      %421 = vmatpush1.bf16.msra.mxu0 %v403
      %422 = vmatprep.subr.bf16.mxu0 0
      %423 = vmatpush1.bf16.msra.mxu0 %v404
      %424 = vmatprep.subr.bf16.mxu0 0
      %425 = vmatpush1.bf16.msra.mxu0 %v405
      %426 = vmatprep.subr.bf16.mxu0 0
      %427 = vmatpush1.bf16.msra.mxu0 %v406
      %428 = vmatprep.subr.bf16.mxu0 0
      %429 = vmatpush1.bf16.msra.mxu0 %v407
      %430 = vmatprep.subr.bf16.mxu0 0
      %431 = vmatpush1.bf16.msra.mxu0 %v408
      %432 = vmatprep.subr.bf16.mxu0 0
      %433 = vmatpush1.bf16.msra.mxu0 %v409
      %434 = vmatprep.subr.bf16.mxu0 0
      %435 = vmatpush1.bf16.msra.mxu0 0
      %436 = vmatprep.subr.bf16.mxu0 0
      %437 = vmatpush1.bf16.msra.mxu0 0
      %438 = vmatprep.subr.bf16.mxu0 0
      %439 = vmatpush1.bf16.msra.mxu0 0
      %440 = vmatprep.subr.bf16.mxu0 0
      %441 = vmatpush1.bf16.msra.mxu0 0
      %442 = vmatprep.subr.bf16.mxu0 0
      %443 = vmatpush1.bf16.msra.mxu0 0
      %444 = vmatprep.subr.bf16.mxu0 0
      %445 = vmatpush1.bf16.msra.mxu0 0
      %446 = vmatprep.subr.bf16.mxu0 0
      %447 = vmatpush1.bf16.msra.mxu0 0
      %448 = vmatprep.subr.bf16.mxu0 0
      %449 = vmatpush1.bf16.msra.mxu0 0
      %450 = vmatprep.mubr.bf16.mxu0 0
      %451 = vmatmul.mubr.bf16.gmra.mrb[0].mxu0 %v354
      %v452 = vpop.f32.mrb[0].mxu0
      %v453 = vadd.f32 %v320, %v452
      %v454 = vpop.f32.mrb[0].mxu0
      %v455 = vpop.f32.mrb[0].mxu0
      %v456 = vadd.f32 %v320, %v455
      %v457 = vpop.f32.mrb[0].mxu0
      %458 = vmatprep.mubr.bf16.mxu0 0
      %459 = vmatmul.mubr.bf16.gmra.mrb[0].mxu0 %v355
      %v460 = vpop.f32.mrb[0].mxu0
      %v461 = vadd.f32 %v320, %v460
      %v462 = vpop.f32.mrb[0].mxu0
      %v463 = vpop.f32.mrb[0].mxu0
      %v464 = vadd.f32 %v320, %v463
      %v465 = vpop.f32.mrb[0].mxu0
      %466 = vmatprep.mubr.bf16.mxu0 0
      %467 = vmatmul.mubr.bf16.gmra.mrb[0].mxu0 %v356
      %v468 = vpop.f32.mrb[0].mxu0
      %v469 = vadd.f32 %v320, %v468
      %v470 = vpop.f32.mrb[0].mxu0
      %v471 = vpop.f32.mrb[0].mxu0
      %v472 = vadd.f32 %v320, %v471
      %v473 = vpop.f32.mrb[0].mxu0
      %474 = vmatprep.mubr.bf16.mxu0 0
      %475 = vmatmul.mubr.bf16.gmra.mrb[0].mxu0 %v357
      %v476 = vpop.f32.mrb[0].mxu0
      %v477 = vadd.f32 %v320, %v476
      %v478 = vpop.f32.mrb[0].mxu0
      %v479 = vpop.f32.mrb[0].mxu0
      %v480 = vadd.f32 %v320, %v479
      %v481 = vpop.f32.mrb[0].mxu0
      %482 = vmatprep.mubr.bf16.mxu0 0
      %483 = vmatmul.mubr.bf16.gmra.mrb[0].mxu0 %v358
      %v484 = vpop.f32.mrb[0].mxu0
      %v485 = vadd.f32 %v320, %v484
      %v486 = vpop.f32.mrb[0].mxu0
      %v487 = vpop.f32.mrb[0].mxu0
      %v488 = vadd.f32 %v320, %v487
      %v489 = vpop.f32.mrb[0].mxu0
      %490 = vmatprep.mubr.bf16.mxu0 0
      %491 = vmatmul.mubr.bf16.gmra.mrb[0].mxu0 %v359
      %v492 = vpop.f32.mrb[0].mxu0
      %v493 = vadd.f32 %v320, %v492
      %v494 = vpop.f32.mrb[0].mxu0
      %v495 = vpop.f32.mrb[0].mxu0
      %v496 = vadd.f32 %v320, %v495
      %v497 = vpop.f32.mrb[0].mxu0
      %498 = vmatprep.mubr.bf16.mxu0 0
      %499 = vmatmul.mubr.bf16.gmra.mrb[0].mxu0 %v360
      %v500 = vpop.f32.mrb[0].mxu0
      %v501 = vadd.f32 %v320, %v500
      %v502 = vpop.f32.mrb[0].mxu0
      %v503 = vpop.f32.mrb[0].mxu0
      %v504 = vadd.f32 %v320, %v503
      %v505 = vpop.f32.mrb[0].mxu0
      %506 = vmatprep.mubr.bf16.mxu0 0
      %507 = vmatmul.mubr.bf16.gmra.mrb[0].mxu0 %v361
      %v508 = vpop.f32.mrb[0].mxu0
      %v509 = vadd.f32 %v320, %v508
      %v510 = vpop.f32.mrb[0].mxu0
      %v511 = vpop.f32.mrb[0].mxu0
      %v512 = vadd.f32 %v320, %v511
      %v513 = vpop.f32.mrb[0].mxu0
      %514 = vdwg.mxu0
      %v515 = vmax.f32 %v453, 0.0
      %v516 = vmax.f32 %v456, 0.0
      %v517 = vmax.f32 %v461, 0.0
      %v518 = vmax.f32 %v464, 0.0
      %v519 = vmax.f32 %v469, 0.0
      %v520 = vmax.f32 %v472, 0.0
      %v521 = vmax.f32 %v477, 0.0
      %v522 = vmax.f32 %v480, 0.0
      %v523 = vmax.f32 %v485, 0.0
      %v524 = vmax.f32 %v488, 0.0
      %v525 = vmax.f32 %v493, 0.0
      %v526 = vmax.f32 %v496, 0.0
      %v527 = vmax.f32 %v501, 0.0
      %v528 = vmax.f32 %v504, 0.0
      %v529 = vmax.f32 %v509, 0.0
      %v530 = vmax.f32 %v512, 0.0
      %v531 = vpack.c.bf16 %v516, %v515
      %v532 = vpack.c.bf16 %v518, %v517
      %v533 = vpack.c.bf16 %v520, %v519
      %v534 = vpack.c.bf16 %v522, %v521
      %v535 = vpack.c.bf16 %v524, %v523
      %v536 = vpack.c.bf16 %v526, %v525
      %v537 = vpack.c.bf16 %v528, %v527
      %v538 = vpack.c.bf16 %v530, %v529
      %v539 = vld [vmem:[%s3] sm:$0xf]
      %v540 = vld [vmem:[%s3 + $0x4] sm:$0xf]
      %v541 = vld [vmem:[%s3 + $0x8] sm:$0xf]
      %v542 = vld [vmem:[%s3 + $0xc] sm:$0xf]
      %v543 = vld [vmem:[%s3 + $0x10] sm:$0xf]
      %v544 = vld [vmem:[%s3 + $0x14] sm:$0xf]
      %v545 = vld [vmem:[%s3 + $0x18] sm:$0xf]
      %v546 = vld [vmem:[%s3 + $0x1c] sm:$0xf]
      %v547 = vld [vmem:[%s3 + $0x20] sm:$0xf]
      %v548 = vld [vmem:[%s3 + $0x24] sm:$0xf]
      %v549 = vld [vmem:[%s3 + $0x28] sm:$0xf]
      %v550 = vld [vmem:[%s3 + $0x2c] sm:$0xf]
      %v551 = vld [vmem:[%s3 + $0x30] sm:$0xf]
      %v552 = vld [vmem:[%s3 + $0x34] sm:$0xf]
      %v553 = vld [vmem:[%s3 + $0x38] sm:$0xf]
      %v554 = vld [vmem:[%s3 + $0x3c] sm:$0xf]
      %v555 = vld [vmem:[%s4] sm:$0x1]
      %v557 = vlaneseq
      %v558 = vshrl.u32 %v557, 7
      %v559 = vsub.s32 0, %v558
      %v560 = vrot.slane %v555, %v559
      %v578 = vunpack.c.l.b16 %v539
      %v579 = vunpack.c.l.b16 %v540
      %v580 = vunpack.c.l.b16 %v541
      %v581 = vunpack.c.l.b16 %v542
      %v582 = vunpack.c.l.b16 %v543
      %v583 = vunpack.c.l.b16 %v544
      %v584 = vunpack.c.l.b16 %v545
      %v585 = vunpack.c.l.b16 %v546
      %v586 = vunpack.c.l.b16 %v547
      %v587 = vunpack.c.l.b16 %v548
      %v588 = vunpack.c.l.b16 %v549
      %v589 = vunpack.c.l.b16 %v550
      %v590 = vunpack.c.l.b16 %v551
      %v591 = vunpack.c.l.b16 %v552
      %v592 = vunpack.c.l.b16 %v553
      %v593 = vunpack.c.l.b16 %v554
      %v594 = vpack.c.b16 %v579, %v578
      %v595 = vpack.c.b16 %v581, %v580
      %v596 = vpack.c.b16 %v583, %v582
      %v597 = vpack.c.b16 %v585, %v584
      %v598 = vpack.c.b16 %v587, %v586
      %v599 = vpack.c.b16 %v589, %v588
      %v600 = vpack.c.b16 %v591, %v590
      %v601 = vpack.c.b16 %v593, %v592
      %610 = vmatprep.subr.bf16.mxu0 0
      %611 = vmatpush1.bf16.msra.mxu0 %v594
      %612 = vmatprep.subr.bf16.mxu0 0
      %613 = vmatpush1.bf16.msra.mxu0 %v595
      %614 = vmatprep.subr.bf16.mxu0 0
      %615 = vmatpush1.bf16.msra.mxu0 %v596
      %616 = vmatprep.subr.bf16.mxu0 0
      %617 = vmatpush1.bf16.msra.mxu0 %v597
      %618 = vmatprep.subr.bf16.mxu0 0
      %619 = vmatpush1.bf16.msra.mxu0 %v598
      %620 = vmatprep.subr.bf16.mxu0 0
      %621 = vmatpush1.bf16.msra.mxu0 %v599
      %622 = vmatprep.subr.bf16.mxu0 0
      %623 = vmatpush1.bf16.msra.mxu0 %v600
      %624 = vmatprep.subr.bf16.mxu0 0
      %625 = vmatpush1.bf16.msra.mxu0 %v601
      %626 = vmatprep.subr.bf16.mxu0 0
      %627 = vmatpush1.bf16.msra.mxu0 0
      %628 = vmatprep.subr.bf16.mxu0 0
      %629 = vmatpush1.bf16.msra.mxu0 0
      %630 = vmatprep.subr.bf16.mxu0 0
      %631 = vmatpush1.bf16.msra.mxu0 0
      %632 = vmatprep.subr.bf16.mxu0 0
      %633 = vmatpush1.bf16.msra.mxu0 0
      %634 = vmatprep.subr.bf16.mxu0 0
      %635 = vmatpush1.bf16.msra.mxu0 0
      %636 = vmatprep.subr.bf16.mxu0 0
      %637 = vmatpush1.bf16.msra.mxu0 0
      %638 = vmatprep.subr.bf16.mxu0 0
      %639 = vmatpush1.bf16.msra.mxu0 0
      %640 = vmatprep.subr.bf16.mxu0 0
      %641 = vmatpush1.bf16.msra.mxu0 0
      %642 = vmatprep.mubr.bf16.mxu0 0
      %643 = vmatmul.mubr.bf16.gmra.mrb[0].mxu0 %v531
      %v644 = vpop.f32.mrb[0].mxu0
      %v645 = vadd.f32 %v560, %v644
      %v646 = vpop.f32.mrb[0].mxu0
      %v647 = vpop.f32.mrb[0].mxu0
      %v648 = vadd.f32 %v560, %v647
      %v649 = vpop.f32.mrb[0].mxu0
      %650 = vmatprep.mubr.bf16.mxu0 0
      %651 = vmatmul.mubr.bf16.gmra.mrb[0].mxu0 %v532
      %v652 = vpop.f32.mrb[0].mxu0
      %v653 = vadd.f32 %v560, %v652
      %v654 = vpop.f32.mrb[0].mxu0
      %v655 = vpop.f32.mrb[0].mxu0
      %v656 = vadd.f32 %v560, %v655
      %v657 = vpop.f32.mrb[0].mxu0
      %658 = vmatprep.mubr.bf16.mxu0 0
      %659 = vmatmul.mubr.bf16.gmra.mrb[0].mxu0 %v533
      %v660 = vpop.f32.mrb[0].mxu0
      %v661 = vadd.f32 %v560, %v660
      %v662 = vpop.f32.mrb[0].mxu0
      %v663 = vpop.f32.mrb[0].mxu0
      %v664 = vadd.f32 %v560, %v663
      %v665 = vpop.f32.mrb[0].mxu0
      %666 = vmatprep.mubr.bf16.mxu0 0
      %667 = vmatmul.mubr.bf16.gmra.mrb[0].mxu0 %v534
      %v668 = vpop.f32.mrb[0].mxu0
      %v669 = vadd.f32 %v560, %v668
      %v670 = vpop.f32.mrb[0].mxu0
      %v671 = vpop.f32.mrb[0].mxu0
      %v672 = vadd.f32 %v560, %v671
      %v673 = vpop.f32.mrb[0].mxu0
      %674 = vmatprep.mubr.bf16.mxu0 0
      %675 = vmatmul.mubr.bf16.gmra.mrb[0].mxu0 %v535
      %v676 = vpop.f32.mrb[0].mxu0
      %v677 = vadd.f32 %v560, %v676
      %v678 = vpop.f32.mrb[0].mxu0
      %v679 = vpop.f32.mrb[0].mxu0
      %v680 = vadd.f32 %v560, %v679
      %v681 = vpop.f32.mrb[0].mxu0
      %682 = vmatprep.mubr.bf16.mxu0 0
      %683 = vmatmul.mubr.bf16.gmra.mrb[0].mxu0 %v536
      %v684 = vpop.f32.mrb[0].mxu0
      %v685 = vadd.f32 %v560, %v684
      %v686 = vpop.f32.mrb[0].mxu0
      %v687 = vpop.f32.mrb[0].mxu0
      %v688 = vadd.f32 %v560, %v687
      %v689 = vpop.f32.mrb[0].mxu0
      %690 = vmatprep.mubr.bf16.mxu0 0
      %691 = vmatmul.mubr.bf16.gmra.mrb[0].mxu0 %v537
      %v692 = vpop.f32.mrb[0].mxu0
      %v693 = vadd.f32 %v560, %v692
      %v694 = vpop.f32.mrb[0].mxu0
      %v695 = vpop.f32.mrb[0].mxu0
      %v696 = vadd.f32 %v560, %v695
      %v697 = vpop.f32.mrb[0].mxu0
      %698 = vmatprep.mubr.bf16.mxu0 0
      %699 = vmatmul.mubr.bf16.gmra.mrb[0].mxu0 %v538
      %v700 = vpop.f32.mrb[0].mxu0
      %v701 = vadd.f32 %v560, %v700
      %v702 = vpop.f32.mrb[0].mxu0
      %v703 = vpop.f32.mrb[0].mxu0
      %v704 = vadd.f32 %v560, %v703
      %v705 = vpop.f32.mrb[0].mxu0
      %706 = vdwg.mxu0
      %v707 = vmax.f32 %v645, 0.0
      %v708 = vmax.f32 %v648, 0.0
      %v709 = vmax.f32 %v653, 0.0
      %v710 = vmax.f32 %v656, 0.0
      %v711 = vmax.f32 %v661, 0.0
      %v712 = vmax.f32 %v664, 0.0
      %v713 = vmax.f32 %v669, 0.0
      %v714 = vmax.f32 %v672, 0.0
      %v715 = vmax.f32 %v677, 0.0
      %v716 = vmax.f32 %v680, 0.0
      %v717 = vmax.f32 %v685, 0.0
      %v718 = vmax.f32 %v688, 0.0
      %v719 = vmax.f32 %v693, 0.0
      %v720 = vmax.f32 %v696, 0.0
      %v721 = vmax.f32 %v701, 0.0
      %v722 = vmax.f32 %v704, 0.0
      %v723 = vpack.c.bf16 %v708, %v707
      %v724 = vpack.c.bf16 %v710, %v709
      %v725 = vpack.c.bf16 %v712, %v711
      %v726 = vpack.c.bf16 %v714, %v713
      %v727 = vpack.c.bf16 %v716, %v715
      %v728 = vpack.c.bf16 %v718, %v717
      %v729 = vpack.c.bf16 %v720, %v719
      %v730 = vpack.c.bf16 %v722, %v721
      %v731 = vld [vmem:[%s5] sm:$0xf]
      %v732 = vld [vmem:[%s5 + $0x4] sm:$0xf]
      %v733 = vld [vmem:[%s5 + $0x8] sm:$0xf]
      %v734 = vld [vmem:[%s5 + $0xc] sm:$0xf]
      %v735 = vld [vmem:[%s5 + $0x10] sm:$0xf]
      %v736 = vld [vmem:[%s5 + $0x14] sm:$0xf]
      %v737 = vld [vmem:[%s5 + $0x18] sm:$0xf]
      %v738 = vld [vmem:[%s5 + $0x1c] sm:$0xf]
      %v739 = vld [vmem:[%s5 + $0x20] sm:$0xf]
      %v740 = vld [vmem:[%s5 + $0x24] sm:$0xf]
      %v741 = vld [vmem:[%s5 + $0x28] sm:$0xf]
      %v742 = vld [vmem:[%s5 + $0x2c] sm:$0xf]
      %v743 = vld [vmem:[%s5 + $0x30] sm:$0xf]
      %v744 = vld [vmem:[%s5 + $0x34] sm:$0xf]
      %v745 = vld [vmem:[%s5 + $0x38] sm:$0xf]
      %v746 = vld [vmem:[%s5 + $0x3c] sm:$0xf]
      %v747 = vld [vmem:[%s6] sm:$0x1]
      %v749 = vlaneseq
      %v750 = vshrl.u32 %v749, 7
      %v751 = vsub.s32 0, %v750
      %v752 = vrot.slane %v747, %v751
      %v770 = vunpack.c.l.b16 %v731
      %v771 = vunpack.c.l.b16 %v732
      %v772 = vunpack.c.l.b16 %v733
      %v773 = vunpack.c.l.b16 %v734
      %v774 = vunpack.c.l.b16 %v735
      %v775 = vunpack.c.l.b16 %v736
      %v776 = vunpack.c.l.b16 %v737
      %v777 = vunpack.c.l.b16 %v738
      %v778 = vunpack.c.l.b16 %v739
      %v779 = vunpack.c.l.b16 %v740
      %v780 = vunpack.c.l.b16 %v741
      %v781 = vunpack.c.l.b16 %v742
      %v782 = vunpack.c.l.b16 %v743
      %v783 = vunpack.c.l.b16 %v744
      %v784 = vunpack.c.l.b16 %v745
      %v785 = vunpack.c.l.b16 %v746
      %v786 = vpack.c.b16 %v771, %v770
      %v787 = vpack.c.b16 %v773, %v772
      %v788 = vpack.c.b16 %v775, %v774
      %v789 = vpack.c.b16 %v777, %v776
      %v790 = vpack.c.b16 %v779, %v778
      %v791 = vpack.c.b16 %v781, %v780
      %v792 = vpack.c.b16 %v783, %v782
      %v793 = vpack.c.b16 %v785, %v784
      %802 = vmatprep.subr.bf16.mxu0 0
      %803 = vmatpush1.bf16.msra.mxu0 %v786
      %804 = vmatprep.subr.bf16.mxu0 0
      %805 = vmatpush1.bf16.msra.mxu0 %v787
      %806 = vmatprep.subr.bf16.mxu0 0
      %807 = vmatpush1.bf16.msra.mxu0 %v788
      %808 = vmatprep.subr.bf16.mxu0 0
      %809 = vmatpush1.bf16.msra.mxu0 %v789
      %810 = vmatprep.subr.bf16.mxu0 0
      %811 = vmatpush1.bf16.msra.mxu0 %v790
      %812 = vmatprep.subr.bf16.mxu0 0
      %813 = vmatpush1.bf16.msra.mxu0 %v791
      %814 = vmatprep.subr.bf16.mxu0 0
      %815 = vmatpush1.bf16.msra.mxu0 %v792
      %816 = vmatprep.subr.bf16.mxu0 0
      %817 = vmatpush1.bf16.msra.mxu0 %v793
      %818 = vmatprep.subr.bf16.mxu0 0
      %819 = vmatpush1.bf16.msra.mxu0 0
      %820 = vmatprep.subr.bf16.mxu0 0
      %821 = vmatpush1.bf16.msra.mxu0 0
      %822 = vmatprep.subr.bf16.mxu0 0
      %823 = vmatpush1.bf16.msra.mxu0 0
      %824 = vmatprep.subr.bf16.mxu0 0
      %825 = vmatpush1.bf16.msra.mxu0 0
      %826 = vmatprep.subr.bf16.mxu0 0
      %827 = vmatpush1.bf16.msra.mxu0 0
      %828 = vmatprep.subr.bf16.mxu0 0
      %829 = vmatpush1.bf16.msra.mxu0 0
      %830 = vmatprep.subr.bf16.mxu0 0
      %831 = vmatpush1.bf16.msra.mxu0 0
      %832 = vmatprep.subr.bf16.mxu0 0
      %833 = vmatpush1.bf16.msra.mxu0 0
      %834 = vmatprep.mubr.bf16.mxu0 0
      %835 = vmatmul.mubr.bf16.gmra.mrb[0].mxu0 %v723
      %v836 = vpop.f32.mrb[0].mxu0
      %v837 = vadd.f32 %v752, %v836
      %v838 = vpop.f32.mrb[0].mxu0
      %v839 = vpop.f32.mrb[0].mxu0
      %v840 = vadd.f32 %v752, %v839
      %v841 = vpop.f32.mrb[0].mxu0
      %842 = vmatprep.mubr.bf16.mxu0 0
      %843 = vmatmul.mubr.bf16.gmra.mrb[0].mxu0 %v724
      %v844 = vpop.f32.mrb[0].mxu0
      %v845 = vadd.f32 %v752, %v844
      %v846 = vpop.f32.mrb[0].mxu0
      %v847 = vpop.f32.mrb[0].mxu0
      %v848 = vadd.f32 %v752, %v847
      %v849 = vpop.f32.mrb[0].mxu0
      %850 = vmatprep.mubr.bf16.mxu0 0
      %851 = vmatmul.mubr.bf16.gmra.mrb[0].mxu0 %v725
      %v852 = vpop.f32.mrb[0].mxu0
      %v853 = vadd.f32 %v752, %v852
      %v854 = vpop.f32.mrb[0].mxu0
      %v855 = vpop.f32.mrb[0].mxu0
      %v856 = vadd.f32 %v752, %v855
      %v857 = vpop.f32.mrb[0].mxu0
      %858 = vmatprep.mubr.bf16.mxu0 0
      %859 = vmatmul.mubr.bf16.gmra.mrb[0].mxu0 %v726
      %v860 = vpop.f32.mrb[0].mxu0
      %v861 = vadd.f32 %v752, %v860
      %v862 = vpop.f32.mrb[0].mxu0
      %v863 = vpop.f32.mrb[0].mxu0
      %v864 = vadd.f32 %v752, %v863
      %v865 = vpop.f32.mrb[0].mxu0
      %866 = vmatprep.mubr.bf16.mxu0 0
      %867 = vmatmul.mubr.bf16.gmra.mrb[0].mxu0 %v727
      %v868 = vpop.f32.mrb[0].mxu0
      %v869 = vadd.f32 %v752, %v868
      %v870 = vpop.f32.mrb[0].mxu0
      %v871 = vpop.f32.mrb[0].mxu0
      %v872 = vadd.f32 %v752, %v871
      %v873 = vpop.f32.mrb[0].mxu0
      %874 = vmatprep.mubr.bf16.mxu0 0
      %875 = vmatmul.mubr.bf16.gmra.mrb[0].mxu0 %v728
      %v876 = vpop.f32.mrb[0].mxu0
      %v877 = vadd.f32 %v752, %v876
      %v878 = vpop.f32.mrb[0].mxu0
      %v879 = vpop.f32.mrb[0].mxu0
      %v880 = vadd.f32 %v752, %v879
      %v881 = vpop.f32.mrb[0].mxu0
      %882 = vmatprep.mubr.bf16.mxu0 0
      %883 = vmatmul.mubr.bf16.gmra.mrb[0].mxu0 %v729
      %v884 = vpop.f32.mrb[0].mxu0
      %v885 = vadd.f32 %v752, %v884
      %v886 = vpop.f32.mrb[0].mxu0
      %v887 = vpop.f32.mrb[0].mxu0
      %v888 = vadd.f32 %v752, %v887
      %v889 = vpop.f32.mrb[0].mxu0
      %890 = vmatprep.mubr.bf16.mxu0 0
      %891 = vmatmul.mubr.bf16.gmra.mrb[0].mxu0 %v730
      %v892 = vpop.f32.mrb[0].mxu0
      %v893 = vadd.f32 %v752, %v892
      %v894 = vpop.f32.mrb[0].mxu0
      %v895 = vpop.f32.mrb[0].mxu0
      %v896 = vadd.f32 %v752, %v895
      %v897 = vpop.f32.mrb[0].mxu0
      %898 = vdwg.mxu0
      %v899 = vadd.f32 %v707, %v837
      %v900 = vadd.f32 %v708, %v840
      %v901 = vadd.f32 %v709, %v845
      %v902 = vadd.f32 %v710, %v848
      %v903 = vadd.f32 %v711, %v853
      %v904 = vadd.f32 %v712, %v856
      %v905 = vadd.f32 %v713, %v861
      %v906 = vadd.f32 %v714, %v864
      %v907 = vadd.f32 %v715, %v869
      %v908 = vadd.f32 %v716, %v872
      %v909 = vadd.f32 %v717, %v877
      %v910 = vadd.f32 %v718, %v880
      %v911 = vadd.f32 %v719, %v885
      %v912 = vadd.f32 %v720, %v888
      %v913 = vadd.f32 %v721, %v893
      %v914 = vadd.f32 %v722, %v896
      %v915 = vpack.c.bf16 %v900, %v899
      %v916 = vpack.c.bf16 %v902, %v901
      %v917 = vpack.c.bf16 %v904, %v903
      %v918 = vpack.c.bf16 %v906, %v905
      %v919 = vpack.c.bf16 %v908, %v907
      %v920 = vpack.c.bf16 %v910, %v909
      %v921 = vpack.c.bf16 %v912, %v911
      %v922 = vpack.c.bf16 %v914, %v913
      %v931 = vunpack.c.l.b16 %v915
      %v932 = vunpack.c.h.b16 %v915
      %v933 = vunpack.c.l.b16 %v916
      %v934 = vunpack.c.h.b16 %v916
      %v935 = vunpack.c.l.b16 %v917
      %v936 = vunpack.c.h.b16 %v917
      %v937 = vunpack.c.l.b16 %v918
      %v938 = vunpack.c.h.b16 %v918
      %v939 = vunpack.c.l.b16 %v919
      %v940 = vunpack.c.h.b16 %v919
      %v941 = vunpack.c.l.b16 %v920
      %v942 = vunpack.c.h.b16 %v920
      %v943 = vunpack.c.l.b16 %v921
      %v944 = vunpack.c.h.b16 %v921
      %v945 = vunpack.c.l.b16 %v922
      %v946 = vunpack.c.h.b16 %v922
      %v947 = vpack.c.b16 %v931, %v931
      %v948 = vpack.c.b16 %v932, %v932
      %v949 = vpack.c.b16 %v933, %v933
      %v950 = vpack.c.b16 %v934, %v934
      %v951 = vpack.c.b16 %v935, %v935
      %v952 = vpack.c.b16 %v936, %v936
      %v953 = vpack.c.b16 %v937, %v937
      %v954 = vpack.c.b16 %v938, %v938
      %v955 = vpack.c.b16 %v939, %v939
      %v956 = vpack.c.b16 %v940, %v940
      %v957 = vpack.c.b16 %v941, %v941
      %v958 = vpack.c.b16 %v942, %v942
      %v959 = vpack.c.b16 %v943, %v943
      %v960 = vpack.c.b16 %v944, %v944
      %v961 = vpack.c.b16 %v945, %v945
      %v962 = vpack.c.b16 %v946, %v946
      %979 = vst [vmem:[%s280] sm:$0xf] %v947
      %980 = vst [vmem:[%s280 + $0x4] sm:$0xf] %v948
      %981 = vst [vmem:[%s280 + $0x8] sm:$0xf] %v949
      %982 = vst [vmem:[%s280 + $0xc] sm:$0xf] %v950
      %983 = vst [vmem:[%s280 + $0x10] sm:$0xf] %v951
      %984 = vst [vmem:[%s280 + $0x14] sm:$0xf] %v952
      %985 = vst [vmem:[%s280 + $0x18] sm:$0xf] %v953
      %986 = vst [vmem:[%s280 + $0x1c] sm:$0xf] %v954
      %987 = vst [vmem:[%s280 + $0x20] sm:$0xf] %v955
      %988 = vst [vmem:[%s280 + $0x24] sm:$0xf] %v956
      %989 = vst [vmem:[%s280 + $0x28] sm:$0xf] %v957
      %990 = vst [vmem:[%s280 + $0x2c] sm:$0xf] %v958
      %991 = vst [vmem:[%s280 + $0x30] sm:$0xf] %v959
      %992 = vst [vmem:[%s280 + $0x34] sm:$0xf] %v960
      %993 = vst [vmem:[%s280 + $0x38] sm:$0xf] %v961
      %994 = vst [vmem:[%s280 + $0x3c] sm:$0xf] %v962
      %s995 = smul.u32 16, %s18
      %p996 = scmp.lt.s32.totalorder %s995, 47
      %s997 = scalar_select %p996, %s995, 47
      %s998 = smul.addr %s997, 4
      %s999 = scalar_lea.vmem %s7, %s998
      // Predicated region
      $region49: #{grappa_forward.2} parent=47 // pred_check
        %p1000 = pneg %p188
      $region50: #{grappa_forward.2} parent=47 // pred_check_branch
        %1002 = sbr.rel (%p1000) target = $region52
      $region51: #{grappa_forward.2} parent=47 // pred_region
        %s1003 = smul.u32 16, %s18
      $region52: #{grappa_forward.2} parent=47 // pred_fallthru
        _
    $region48: #{grappa_forward.2} parent=5 // pred_fallthru
      _
    %p1004 = scmp.le.s32.totalorder 2, %s13
    // Predicated region
    $region53: #{grappa_forward.2} parent=5 // pred_check
      %p1005 = pneg %p1004
    $region54: #{grappa_forward.2} parent=5 // pred_check_branch
      %1007 = sbr.rel (%p1005) target = $region56
    $region55: #{grappa_forward.2} parent=5 // pred_region
      %s1008 = ssub.s32 %s13, 2
      // Predicated region
      $region57: #{grappa_forward.2} parent=55 // pred_check
        %p1009 = pneg %p194
      $region58: #{grappa_forward.2} parent=55 // pred_check_branch
        %1011 = sbr.rel (%p1009) target = $region60
      $region59: #{grappa_forward.2} parent=55 // pred_region
        %s1012 = smul.u32 16, %s19
        %p1013 = scmp.lt.s32.totalorder %s1012, 47
        %s1014 = scalar_select %p1013, %s1012, 47
        %s1015 = smul.addr %s1014, 4
        %s1016 = scalar_lea.vmem %s7, %s1015
      $region60: #{grappa_forward.2} parent=55 // pred_fallthru
        _
    $region56: #{grappa_forward.2} parent=5 // pred_fallthru
      _
  $region6: #{grappa_forward.2} parent=0 // loop_footer
    %s17 = sadd.s32 1, %s13
  $region7: #{grappa_forward.2} parent=0 // loop_footer_branch
    %12 = sbr.rel target = $region3
  $region8: #{grappa_forward.2} parent=0 // loop_exit
    _

// kernel: grappa_forward.3
$region0: #{grappa_forward.3}
  #allocation0 [shape = 'u32[]', space=smem, size = 0x4, offset = 0x4, fixed_abs, tag = 'smem constant byte address 0x4 - core index']
  #allocation1 [shape = 'u32[144,128]{1,0:T(1,128)}', space=vmem, size = 0x12000, scoped, tag = 'internal scratch']
  %s0 = inlined_call_operand.vmem [shape: bf16[32,128], index: 0, kind: input, shape index: {}]
  %s1 = inlined_call_operand.vmem [shape: bf16[128,128], index: 1, kind: input, shape index: {}]
  %s2 = inlined_call_operand.vmem [shape: f32[1,128], index: 2, kind: input, shape index: {}]
  %s3 = inlined_call_operand.vmem [shape: bf16[128,128], index: 3, kind: input, shape index: {}]
  %s4 = inlined_call_operand.vmem [shape: f32[1,128], index: 4, kind: input, shape index: {}]
  %s5 = inlined_call_operand.vmem [shape: bf16[128,128], index: 5, kind: input, shape index: {}]
  %s6 = inlined_call_operand.vmem [shape: f32[1,128], index: 6, kind: input, shape index: {}]
  %s7 = inlined_call_operand.vmem [shape: bf16[32,128], index: 7, kind: output, shape index: {}]
  %s8 = sld [smem:[#allocation0]]
  $region38: #{grappa_forward.3} parent=0
    _
  %s10 = ssub.s32 1, %s8
  %s11 = scalar_select 0, %s10, %s8
  // Predicated region
  $region2: #{grappa_forward.3} parent=0 // pred_check
    _
  $region3: #{grappa_forward.3} parent=0 // pred_check_branch
    %13 = sbr.rel (0) target = $region5
  $region4: #{grappa_forward.3} parent=0 // pred_region
    _
  $region5: #{grappa_forward.3} parent=0 // pred_fallthru
    _
  // Predicated region
  $region6: #{grappa_forward.3} parent=0 // pred_check
    _
  $region7: #{grappa_forward.3} parent=0 // pred_check_branch
    %15 = sbr.rel (0) target = $region9
  $region8: #{grappa_forward.3} parent=0 // pred_region
    _
  $region9: #{grappa_forward.3} parent=0 // pred_fallthru
    _
  // Predicated region
  $region10: #{grappa_forward.3} parent=0 // pred_check
    _
  $region11: #{grappa_forward.3} parent=0 // pred_check_branch
    %17 = sbr.rel (0) target = $region13
  $region12: #{grappa_forward.3} parent=0 // pred_region
    _
  $region13: #{grappa_forward.3} parent=0 // pred_fallthru
    _
  // Predicated region
  $region14: #{grappa_forward.3} parent=0 // pred_check
    _
  $region15: #{grappa_forward.3} parent=0 // pred_check_branch
    %19 = sbr.rel (0) target = $region17
  $region16: #{grappa_forward.3} parent=0 // pred_region
    _
  $region17: #{grappa_forward.3} parent=0 // pred_fallthru
    _
  // Predicated region
  $region18: #{grappa_forward.3} parent=0 // pred_check
    _
  $region19: #{grappa_forward.3} parent=0 // pred_check_branch
    %21 = sbr.rel (0) target = $region21
  $region20: #{grappa_forward.3} parent=0 // pred_region
    _
  $region21: #{grappa_forward.3} parent=0 // pred_fallthru
    _
  // Predicated region
  $region22: #{grappa_forward.3} parent=0 // pred_check
    _
  $region23: #{grappa_forward.3} parent=0 // pred_check_branch
    %23 = sbr.rel (0) target = $region25
  $region24: #{grappa_forward.3} parent=0 // pred_region
    _
  $region25: #{grappa_forward.3} parent=0 // pred_fallthru
    _
  // Predicated region
  $region26: #{grappa_forward.3} parent=0 // pred_check
    _
  $region27: #{grappa_forward.3} parent=0 // pred_check_branch
    %25 = sbr.rel (0) target = $region29
  $region28: #{grappa_forward.3} parent=0 // pred_region
    _
  $region29: #{grappa_forward.3} parent=0 // pred_fallthru
    _
  %v27 = vld [vmem:[%s0] sm:$0xf]
  %v28 = vld [vmem:[%s0 + $0x4] sm:$0xf]
  %v29 = vld [vmem:[%s0 + $0x8] sm:$0xf]
  %v30 = vld [vmem:[%s0 + $0xc] sm:$0xf]
  %v31 = vld [vmem:[%s1] sm:$0xf]
  %v32 = vld [vmem:[%s1 + $0x4] sm:$0xf]
  %v33 = vld [vmem:[%s1 + $0x8] sm:$0xf]
  %v34 = vld [vmem:[%s1 + $0xc] sm:$0xf]
  %v35 = vld [vmem:[%s1 + $0x10] sm:$0xf]
  %v36 = vld [vmem:[%s1 + $0x14] sm:$0xf]
  %v37 = vld [vmem:[%s1 + $0x18] sm:$0xf]
  %v38 = vld [vmem:[%s1 + $0x1c] sm:$0xf]
  %v39 = vld [vmem:[%s1 + $0x20] sm:$0xf]
  %v40 = vld [vmem:[%s1 + $0x24] sm:$0xf]
  %v41 = vld [vmem:[%s1 + $0x28] sm:$0xf]
  %v42 = vld [vmem:[%s1 + $0x2c] sm:$0xf]
  %v43 = vld [vmem:[%s1 + $0x30] sm:$0xf]
  %v44 = vld [vmem:[%s1 + $0x34] sm:$0xf]
  %v45 = vld [vmem:[%s1 + $0x38] sm:$0xf]
  %v46 = vld [vmem:[%s1 + $0x3c] sm:$0xf]
  %v47 = vld [vmem:[%s2] sm:$0x1]
  %v49 = vlaneseq
  %v50 = vshrl.u32 %v49, 7
  %v51 = vsub.s32 0, %v50
  %v52 = vrot.slane %v47, %v51
  %v58 = vunpack.c.l.b16 %v27
  %v59 = vunpack.c.l.b16 %v28
  %v60 = vunpack.c.l.b16 %v29
  %v61 = vunpack.c.l.b16 %v30
  %v62 = vpack.c.b16 %v59, %v58
  %v63 = vpack.c.b16 %v61, %v60
  %v82 = vunpack.c.l.b16 %v31
  %v83 = vunpack.c.l.b16 %v32
  %v84 = vunpack.c.l.b16 %v33
  %v85 = vunpack.c.l.b16 %v34
  %v86 = vunpack.c.l.b16 %v35
  %v87 = vunpack.c.l.b16 %v36
  %v88 = vunpack.c.l.b16 %v37
  %v89 = vunpack.c.l.b16 %v38
  %v90 = vunpack.c.l.b16 %v39
  %v91 = vunpack.c.l.b16 %v40
  %v92 = vunpack.c.l.b16 %v41
  %v93 = vunpack.c.l.b16 %v42
  %v94 = vunpack.c.l.b16 %v43
  %v95 = vunpack.c.l.b16 %v44
  %v96 = vunpack.c.l.b16 %v45
  %v97 = vunpack.c.l.b16 %v46
  %v98 = vpack.c.b16 %v83, %v82
  %v99 = vpack.c.b16 %v85, %v84
  %v100 = vpack.c.b16 %v87, %v86
  %v101 = vpack.c.b16 %v89, %v88
  %v102 = vpack.c.b16 %v91, %v90
  %v103 = vpack.c.b16 %v93, %v92
  %v104 = vpack.c.b16 %v95, %v94
  %v105 = vpack.c.b16 %v97, %v96
  %114 = vmatprep.subr.bf16.mxu0 0
  %115 = vmatpush1.bf16.msra.mxu0 %v98
  %116 = vmatprep.subr.bf16.mxu0 0
  %117 = vmatpush1.bf16.msra.mxu0 %v99
  %118 = vmatprep.subr.bf16.mxu0 0
  %119 = vmatpush1.bf16.msra.mxu0 %v100
  %120 = vmatprep.subr.bf16.mxu0 0
  %121 = vmatpush1.bf16.msra.mxu0 %v101
  %122 = vmatprep.subr.bf16.mxu0 0
  %123 = vmatpush1.bf16.msra.mxu0 %v102
  %124 = vmatprep.subr.bf16.mxu0 0
  %125 = vmatpush1.bf16.msra.mxu0 %v103
  %126 = vmatprep.subr.bf16.mxu0 0
  %127 = vmatpush1.bf16.msra.mxu0 %v104
  %128 = vmatprep.subr.bf16.mxu0 0
  %129 = vmatpush1.bf16.msra.mxu0 %v105
  %130 = vmatprep.subr.bf16.mxu0 0
  %131 = vmatpush1.bf16.msra.mxu0 0
  %132 = vmatprep.subr.bf16.mxu0 0
  %133 = vmatpush1.bf16.msra.mxu0 0
  %134 = vmatprep.subr.bf16.mxu0 0
  %135 = vmatpush1.bf16.msra.mxu0 0
  %136 = vmatprep.subr.bf16.mxu0 0
  %137 = vmatpush1.bf16.msra.mxu0 0
  %138 = vmatprep.subr.bf16.mxu0 0
  %139 = vmatpush1.bf16.msra.mxu0 0
  %140 = vmatprep.subr.bf16.mxu0 0
  %141 = vmatpush1.bf16.msra.mxu0 0
  %142 = vmatprep.subr.bf16.mxu0 0
  %143 = vmatpush1.bf16.msra.mxu0 0
  %144 = vmatprep.subr.bf16.mxu0 0
  %145 = vmatpush1.bf16.msra.mxu0 0
  %146 = vmatprep.mubr.bf16.mxu0 0
  %147 = vmatmul.mubr.bf16.gmra.mrb[0].mxu0 %v62
  %v148 = vpop.f32.mrb[0].mxu0
  %v149 = vadd.f32 %v52, %v148
  %v150 = vpop.f32.mrb[0].mxu0
  %v151 = vpop.f32.mrb[0].mxu0
  %v152 = vadd.f32 %v52, %v151
  %v153 = vpop.f32.mrb[0].mxu0
  %154 = vmatprep.mubr.bf16.mxu0 0
  %155 = vmatmul.mubr.bf16.gmra.mrb[0].mxu0 %v63
  %v156 = vpop.f32.mrb[0].mxu0
  %v157 = vadd.f32 %v52, %v156
  %v158 = vpop.f32.mrb[0].mxu0
  %v159 = vpop.f32.mrb[0].mxu0
  %v160 = vadd.f32 %v52, %v159
  %v161 = vpop.f32.mrb[0].mxu0
  %162 = vdwg.mxu0
  %v163 = vmax.f32 %v149, 0.0
  %v164 = vmax.f32 %v152, 0.0
  %v165 = vmax.f32 %v157, 0.0
  %v166 = vmax.f32 %v160, 0.0
  %v167 = vpack.c.bf16 %v164, %v163
  %v168 = vpack.c.bf16 %v166, %v165
  %v169 = vld [vmem:[%s3] sm:$0xf]
  %v170 = vld [vmem:[%s3 + $0x4] sm:$0xf]
  %v171 = vld [vmem:[%s3 + $0x8] sm:$0xf]
  %v172 = vld [vmem:[%s3 + $0xc] sm:$0xf]
  %v173 = vld [vmem:[%s3 + $0x10] sm:$0xf]
  %v174 = vld [vmem:[%s3 + $0x14] sm:$0xf]
  %v175 = vld [vmem:[%s3 + $0x18] sm:$0xf]
  %v176 = vld [vmem:[%s3 + $0x1c] sm:$0xf]
  %v177 = vld [vmem:[%s3 + $0x20] sm:$0xf]
  %v178 = vld [vmem:[%s3 + $0x24] sm:$0xf]
  %v179 = vld [vmem:[%s3 + $0x28] sm:$0xf]
  %v180 = vld [vmem:[%s3 + $0x2c] sm:$0xf]
  %v181 = vld [vmem:[%s3 + $0x30] sm:$0xf]
  %v182 = vld [vmem:[%s3 + $0x34] sm:$0xf]
  %v183 = vld [vmem:[%s3 + $0x38] sm:$0xf]
  %v184 = vld [vmem:[%s3 + $0x3c] sm:$0xf]
  %v185 = vld [vmem:[%s4] sm:$0x1]
  %v187 = vlaneseq
  %v188 = vshrl.u32 %v187, 7
  %v189 = vsub.s32 0, %v188
  %v190 = vrot.slane %v185, %v189
  %v208 = vunpack.c.l.b16 %v169
  %v209 = vunpack.c.l.b16 %v170
  %v210 = vunpack.c.l.b16 %v171
  %v211 = vunpack.c.l.b16 %v172
  %v212 = vunpack.c.l.b16 %v173
  %v213 = vunpack.c.l.b16 %v174
  %v214 = vunpack.c.l.b16 %v175
  %v215 = vunpack.c.l.b16 %v176
  %v216 = vunpack.c.l.b16 %v177
  %v217 = vunpack.c.l.b16 %v178
  %v218 = vunpack.c.l.b16 %v179
  %v219 = vunpack.c.l.b16 %v180
  %v220 = vunpack.c.l.b16 %v181
  %v221 = vunpack.c.l.b16 %v182
  %v222 = vunpack.c.l.b16 %v183
  %v223 = vunpack.c.l.b16 %v184
  %v224 = vpack.c.b16 %v209, %v208
  %v225 = vpack.c.b16 %v211, %v210
  %v226 = vpack.c.b16 %v213, %v212
  %v227 = vpack.c.b16 %v215, %v214
  %v228 = vpack.c.b16 %v217, %v216
  %v229 = vpack.c.b16 %v219, %v218
  %v230 = vpack.c.b16 %v221, %v220
  %v231 = vpack.c.b16 %v223, %v222
  %240 = vmatprep.subr.bf16.mxu0 0
  %241 = vmatpush1.bf16.msra.mxu0 %v224
  %242 = vmatprep.subr.bf16.mxu0 0
  %243 = vmatpush1.bf16.msra.mxu0 %v225
  %244 = vmatprep.subr.bf16.mxu0 0
  %245 = vmatpush1.bf16.msra.mxu0 %v226
  %246 = vmatprep.subr.bf16.mxu0 0
  %247 = vmatpush1.bf16.msra.mxu0 %v227
  %248 = vmatprep.subr.bf16.mxu0 0
  %249 = vmatpush1.bf16.msra.mxu0 %v228
  %250 = vmatprep.subr.bf16.mxu0 0
  %251 = vmatpush1.bf16.msra.mxu0 %v229
  %252 = vmatprep.subr.bf16.mxu0 0
  %253 = vmatpush1.bf16.msra.mxu0 %v230
  %254 = vmatprep.subr.bf16.mxu0 0
  %255 = vmatpush1.bf16.msra.mxu0 %v231
  %256 = vmatprep.subr.bf16.mxu0 0
  %257 = vmatpush1.bf16.msra.mxu0 0
  %258 = vmatprep.subr.bf16.mxu0 0
  %259 = vmatpush1.bf16.msra.mxu0 0
  %260 = vmatprep.subr.bf16.mxu0 0
  %261 = vmatpush1.bf16.msra.mxu0 0
  %262 = vmatprep.subr.bf16.mxu0 0
  %263 = vmatpush1.bf16.msra.mxu0 0
  %264 = vmatprep.subr.bf16.mxu0 0
  %265 = vmatpush1.bf16.msra.mxu0 0
  %266 = vmatprep.subr.bf16.mxu0 0
  %267 = vmatpush1.bf16.msra.mxu0 0
  %268 = vmatprep.subr.bf16.mxu0 0
  %269 = vmatpush1.bf16.msra.mxu0 0
  %270 = vmatprep.subr.bf16.mxu0 0
  %271 = vmatpush1.bf16.msra.mxu0 0
  %272 = vmatprep.mubr.bf16.mxu0 0
  %273 = vmatmul.mubr.bf16.gmra.mrb[0].mxu0 %v167
  %v274 = vpop.f32.mrb[0].mxu0
  %v275 = vadd.f32 %v190, %v274
  %v276 = vpop.f32.mrb[0].mxu0
  %v277 = vpop.f32.mrb[0].mxu0
  %v278 = vadd.f32 %v190, %v277
  %v279 = vpop.f32.mrb[0].mxu0
  %280 = vmatprep.mubr.bf16.mxu0 0
  %281 = vmatmul.mubr.bf16.gmra.mrb[0].mxu0 %v168
  %v282 = vpop.f32.mrb[0].mxu0
  %v283 = vadd.f32 %v190, %v282
  %v284 = vpop.f32.mrb[0].mxu0
  %v285 = vpop.f32.mrb[0].mxu0
  %v286 = vadd.f32 %v190, %v285
  %v287 = vpop.f32.mrb[0].mxu0
  %288 = vdwg.mxu0
  %v289 = vmax.f32 %v275, 0.0
  %v290 = vmax.f32 %v278, 0.0
  %v291 = vmax.f32 %v283, 0.0
  %v292 = vmax.f32 %v286, 0.0
  %v293 = vpack.c.bf16 %v290, %v289
  %v294 = vpack.c.bf16 %v292, %v291
  %v295 = vld [vmem:[%s5] sm:$0xf]
  %v296 = vld [vmem:[%s5 + $0x4] sm:$0xf]
  %v297 = vld [vmem:[%s5 + $0x8] sm:$0xf]
  %v298 = vld [vmem:[%s5 + $0xc] sm:$0xf]
  %v299 = vld [vmem:[%s5 + $0x10] sm:$0xf]
  %v300 = vld [vmem:[%s5 + $0x14] sm:$0xf]
  %v301 = vld [vmem:[%s5 + $0x18] sm:$0xf]
  %v302 = vld [vmem:[%s5 + $0x1c] sm:$0xf]
  %v303 = vld [vmem:[%s5 + $0x20] sm:$0xf]
  %v304 = vld [vmem:[%s5 + $0x24] sm:$0xf]
  %v305 = vld [vmem:[%s5 + $0x28] sm:$0xf]
  %v306 = vld [vmem:[%s5 + $0x2c] sm:$0xf]
  %v307 = vld [vmem:[%s5 + $0x30] sm:$0xf]
  %v308 = vld [vmem:[%s5 + $0x34] sm:$0xf]
  %v309 = vld [vmem:[%s5 + $0x38] sm:$0xf]
  %v310 = vld [vmem:[%s5 + $0x3c] sm:$0xf]
  %v311 = vld [vmem:[%s6] sm:$0x1]
  %v313 = vlaneseq
  %v314 = vshrl.u32 %v313, 7
  %v315 = vsub.s32 0, %v314
  %v316 = vrot.slane %v311, %v315
  %v334 = vunpack.c.l.b16 %v295
  %v335 = vunpack.c.l.b16 %v296
  %v336 = vunpack.c.l.b16 %v297
  %v337 = vunpack.c.l.b16 %v298
  %v338 = vunpack.c.l.b16 %v299
  %v339 = vunpack.c.l.b16 %v300
  %v340 = vunpack.c.l.b16 %v301
  %v341 = vunpack.c.l.b16 %v302
  %v342 = vunpack.c.l.b16 %v303
  %v343 = vunpack.c.l.b16 %v304
  %v344 = vunpack.c.l.b16 %v305
  %v345 = vunpack.c.l.b16 %v306
  %v346 = vunpack.c.l.b16 %v307
  %v347 = vunpack.c.l.b16 %v308
  %v348 = vunpack.c.l.b16 %v309
  %v349 = vunpack.c.l.b16 %v310
  %v350 = vpack.c.b16 %v335, %v334
  %v351 = vpack.c.b16 %v337, %v336
  %v352 = vpack.c.b16 %v339, %v338
  %v353 = vpack.c.b16 %v341, %v340
  %v354 = vpack.c.b16 %v343, %v342
  %v355 = vpack.c.b16 %v345, %v344
  %v356 = vpack.c.b16 %v347, %v346
  %v357 = vpack.c.b16 %v349, %v348
  %366 = vmatprep.subr.bf16.mxu0 0
  %367 = vmatpush1.bf16.msra.mxu0 %v350
  %368 = vmatprep.subr.bf16.mxu0 0
  %369 = vmatpush1.bf16.msra.mxu0 %v351
  %370 = vmatprep.subr.bf16.mxu0 0
  %371 = vmatpush1.bf16.msra.mxu0 %v352
  %372 = vmatprep.subr.bf16.mxu0 0
  %373 = vmatpush1.bf16.msra.mxu0 %v353
  %374 = vmatprep.subr.bf16.mxu0 0
  %375 = vmatpush1.bf16.msra.mxu0 %v354
  %376 = vmatprep.subr.bf16.mxu0 0
  %377 = vmatpush1.bf16.msra.mxu0 %v355
  %378 = vmatprep.subr.bf16.mxu0 0
  %379 = vmatpush1.bf16.msra.mxu0 %v356
  %380 = vmatprep.subr.bf16.mxu0 0
  %381 = vmatpush1.bf16.msra.mxu0 %v357
  %382 = vmatprep.subr.bf16.mxu0 0
  %383 = vmatpush1.bf16.msra.mxu0 0
  %384 = vmatprep.subr.bf16.mxu0 0
  %385 = vmatpush1.bf16.msra.mxu0 0
  %386 = vmatprep.subr.bf16.mxu0 0
  %387 = vmatpush1.bf16.msra.mxu0 0
  %388 = vmatprep.subr.bf16.mxu0 0
  %389 = vmatpush1.bf16.msra.mxu0 0
  %390 = vmatprep.subr.bf16.mxu0 0
  %391 = vmatpush1.bf16.msra.mxu0 0
  %392 = vmatprep.subr.bf16.mxu0 0
  %393 = vmatpush1.bf16.msra.mxu0 0
  %394 = vmatprep.subr.bf16.mxu0 0
  %395 = vmatpush1.bf16.msra.mxu0 0
  %396 = vmatprep.subr.bf16.mxu0 0
  %397 = vmatpush1.bf16.msra.mxu0 0
  %398 = vmatprep.mubr.bf16.mxu0 0
  %399 = vmatmul.mubr.bf16.gmra.mrb[0].mxu0 %v293
  %v400 = vpop.f32.mrb[0].mxu0
  %v401 = vadd.f32 %v316, %v400
  %v402 = vpop.f32.mrb[0].mxu0
  %v403 = vpop.f32.mrb[0].mxu0
  %v404 = vadd.f32 %v316, %v403
  %v405 = vpop.f32.mrb[0].mxu0
  %406 = vmatprep.mubr.bf16.mxu0 0
  %407 = vmatmul.mubr.bf16.gmra.mrb[0].mxu0 %v294
  %v408 = vpop.f32.mrb[0].mxu0
  %v409 = vadd.f32 %v316, %v408
  %v410 = vpop.f32.mrb[0].mxu0
  %v411 = vpop.f32.mrb[0].mxu0
  %v412 = vadd.f32 %v316, %v411
  %v413 = vpop.f32.mrb[0].mxu0
  %414 = vdwg.mxu0
  %v415 = vadd.f32 %v289, %v401
  %v416 = vadd.f32 %v290, %v404
  %v417 = vadd.f32 %v291, %v409
  %v418 = vadd.f32 %v292, %v412
  %v419 = vpack.c.bf16 %v416, %v415
  %v420 = vpack.c.bf16 %v418, %v417
  %v423 = vunpack.c.l.b16 %v419
  %v424 = vunpack.c.h.b16 %v419
  %v425 = vunpack.c.l.b16 %v420
  %v426 = vunpack.c.h.b16 %v420
  %v427 = vpack.c.b16 %v423, %v423
  %v428 = vpack.c.b16 %v424, %v424
  %v429 = vpack.c.b16 %v425, %v425
  %v430 = vpack.c.b16 %v426, %v426
  %435 = vst [vmem:[%s7] sm:$0xf] %v427
  %436 = vst [vmem:[%s7 + $0x4] sm:$0xf] %v428
  %437 = vst [vmem:[%s7 + $0x8] sm:$0xf] %v429
  %438 = vst [vmem:[%s7 + $0xc] sm:$0xf] %v430
  // Predicated region
  $region30: #{grappa_forward.3} parent=0 // pred_check
    _
  $region31: #{grappa_forward.3} parent=0 // pred_check_branch
    %440 = sbr.rel (0) target = $region33
  $region32: #{grappa_forward.3} parent=0 // pred_region
    _
  $region33: #{grappa_forward.3} parent=0 // pred_fallthru
    _
  // Predicated region
  $region34: #{grappa_forward.3} parent=0 // pred_check
    _
  $region35: #{grappa_forward.3} parent=0 // pred_check_branch
    %442 = sbr.rel (0) target = $region37
  $region36: #{grappa_forward.3} parent=0 // pred_region
    _
  $region37: #{grappa_forward.3} parent=0 // pred_fallthru
    _

</llo_original>
